<compile_context>
chip_gen: v7x
topology: tpu7x:2x2x1
jax: 0.10.0
libtpu: 0.0.40
codegen_flags: <defaults>
</compile_context>

<pallas_src>
import numpy as np
import jax
import jax.numpy as jnp
from jax.experimental import pallas as pl
from jax.experimental.pallas import tpu as pltpu


# ----------------------------------------------------------------------------
# Fused kernel: conv1(+ReLU+pool) -> conv2(+ReLU+pool) -> 2-layer LSTM -> FC
# Everything stays in VMEM/vregs; only the tiny (B, 1) result is written out.
# ----------------------------------------------------------------------------
def cnn_lstm_kernel(xcol_ref, w1_ref, b1_ref, w2_ref, b2_ref,
                    wih0_ref, whh0_ref, bl0_ref,
                    wih1_ref, whh1_ref, bl1_ref,
                    fcw_ref, fcb_ref, out_ref):
    B, L, KC1 = xcol_ref.shape          # conv1 im2col: (B, L_conv1, K*Cin)
    C1 = w1_ref.shape[1]                # 64
    C2 = w2_ref.shape[1]                # 128
    K2 = w2_ref.shape[0] // C1          # 3
    H = whh0_ref.shape[0]               # hidden size (32)
    T1 = L // 2                         # length after pool 1
    T2 = T1 // 2                        # length after pool 2 (LSTM steps)

    # ---- Conv1 as ONE im2col matmul (K*Cin-deep) + bias + ReLU + MaxPool(2,2)
    xc = xcol_ref[...].reshape(B * L, KC1)
    h1 = jnp.dot(xc, w1_ref[...], preferred_element_type=jnp.float32) + b1_ref[...]
    h1 = jnp.maximum(h1, 0.0)
    p1 = jnp.max(h1.reshape(B, T1, 2, C1), axis=2)            # (B, T1, C1)

    # ---- Conv2: in-kernel zero pad + im2col -> ONE 192-deep matmul
    zpad = jnp.zeros((B, 1, C1), jnp.float32)
    p1p = jnp.concatenate([zpad, p1, zpad], axis=1)            # (B, T1+2, C1)
    taps = [p1p[:, k:k + T1, :].reshape(B * T1, C1) for k in range(K2)]
    cols = jnp.concatenate(taps, axis=-1)                      # (B*T1, K2*C1)
    h2 = jnp.dot(cols, w2_ref[...], preferred_element_type=jnp.float32) + b2_ref[...]
    h2 = jnp.maximum(h2, 0.0)
    feat = jnp.max(h2.reshape(B, T2, 2, C2), axis=2)           # (B, T2, C2=128)

    # ---- LSTM layer-0 input projection hoisted out of the recurrence:
    #      one (B*T2, 128) @ (128, 4H) matmul + fused bias, done once.
    gx0 = (jnp.dot(feat.reshape(B * T2, C2), wih0_ref[...],
                   preferred_element_type=jnp.float32)
           + bl0_ref[...]).reshape(B, T2, 4 * H)

    whh0 = whh0_ref[...]
    wih1 = wih1_ref[...]
    whh1 = whh1_ref[...]
    bl1 = bl1_ref[...]

    def gates(pre):
        # Whole-vreg EUP transcendentals on (B, 4H); slice the results.
        s = jax.nn.sigmoid(pre)
        t = jnp.tanh(pre)
        return s[:, 0:H], s[:, H:2 * H], t[:, 2 * H:3 * H], s[:, 3 * H:4 * H]

    h_0 = jnp.zeros((B, H), jnp.float32)
    c_0 = jnp.zeros((B, H), jnp.float32)
    h_1 = jnp.zeros((B, H), jnp.float32)
    c_1 = jnp.zeros((B, H), jnp.float32)

    # TODO(synk): nn.LSTM inter-layer dropout omitted (dropout=0.0 / inference is identity).
    # T2 is tiny & static -> Python unroll; use lax.fori_loop(..., unroll=k) if T grows.
    for t in range(T2):
        # Layer 0: only the recurrent matmul remains on the serial path.
        g0 = gx0[:, t, :] + jnp.dot(h_0, whh0, preferred_element_type=jnp.float32)
        i0, f0, gg0, o0 = gates(g0)
        c_0 = f0 * c_0 + i0 * gg0
        h_0 = o0 * jnp.tanh(c_0)

        # Layer 1 (input depends on layer-0 h, cannot be hoisted).
        g1 = (jnp.dot(h_0, wih1, preferred_element_type=jnp.float32)
              + jnp.dot(h_1, whh1, preferred_element_type=jnp.float32) + bl1)
        i1, f1, gg1, o1 = gates(g1)
        c_1 = f1 * c_1 + i1 * gg1
        h_1 = o1 * jnp.tanh(c_1)

    # FC on the last timestep's top-layer hidden state + Sigmoid.
    y = jnp.dot(h_1, fcw_ref[...], preferred_element_type=jnp.float32) + fcb_ref[...]
    out_ref[...] = jax.nn.sigmoid(y)


# ----------------------------------------------------------------------------
# Wrapper: plain-JAX glue only (padding, im2col of the raw input, transposes).
# ----------------------------------------------------------------------------
def cnn_lstm_forward(x, params):
    """x: (B, L, input_size) float32 — same data the PyTorch module consumes."""
    B, L, Cin = x.shape
    Cout1, _, K = params["w1"].shape
    Cout2 = params["w2"].shape[0]
    H = params["w_hh0"].shape[1]

    # Conv1: pad=1, stride=1 -> im2col built in the wrapper (tiny, fuses into input prep).
    x_pad = jnp.pad(x, ((0, 0), (1, 1), (0, 0)))               # (B, L+2, Cin)
    L1 = L + 2 - (K - 1)                                       # conv1 output length
    xcol = jnp.concatenate([x_pad[:, k:k + L1, :] for k in range(K)], axis=-1)  # (B, L1, K*Cin)

    # Conv weights -> (K*Cin, Cout) matching the im2col channel order.
    w1m = jnp.transpose(params["w1"], (2, 1, 0)).reshape(K * Cin, Cout1)
    w2m = jnp.transpose(params["w2"], (2, 1, 0)).reshape(3 * Cout1, Cout2)

    # LSTM weights pre-transposed so the kernel does x @ W_ih^T, h @ W_hh^T.
    wih0 = params["w_ih0"].T                                   # (128, 4H)
    whh0 = params["w_hh0"].T                                   # (H, 4H)
    b0 = (params["b_ih0"] + params["b_hh0"]).reshape(1, 4 * H)
    wih1 = params["w_ih1"].T                                   # (H, 4H)
    whh1 = params["w_hh1"].T                                   # (H, 4H)
    b1l = (params["b_ih1"] + params["b_hh1"]).reshape(1, 4 * H)
    fcw = params["fc_w"].T                                     # (H, 1)
    fcb = params["fc_b"].reshape(1, 1)

    vm = pl.BlockSpec(memory_space=pltpu.MemorySpace.VMEM)
    return pl.pallas_call(
        cnn_lstm_kernel,
        out_shape=jax.ShapeDtypeStruct((B, 1), jnp.float32),
        in_specs=[vm] * 13,
        out_specs=vm,
    )(xcol, w1m, params["b1"].reshape(1, Cout1),
      w2m, params["b2"].reshape(1, Cout2),
      wih0, whh0, b0, wih1, whh1, b1l, fcw, fcb)


# ----------------------------------------------------------------------------
# Pure-JAX reference (mirrors the PyTorch forward) for a numeric sanity check.
# ----------------------------------------------------------------------------
def reference_forward(x, params):
    B, L, _ = x.shape
    H = params["w_hh0"].shape[1]

    def conv_relu_pool(h, w, b):
        Cout, _, K = w.shape
        Lh = h.shape[1]
        hp = jnp.pad(h, ((0, 0), (1, 1), (0, 0)))
        wt = jnp.transpose(w, (2, 1, 0))
        Lc = Lh + 2 - (K - 1)
        out = sum(hp[:, dk:dk + Lc, :] @ wt[dk] for dk in range(K)) + b
        out = jnp.maximum(out, 0.0)
        T = Lc // 2
        return jnp.max(out[:, :2 * T, :].reshape(B, T, 2, Cout), axis=2)

    feat = conv_relu_pool(conv_relu_pool(x, params["w1"], params["b1"]),
                          params["w2"], params["b2"])

    def cell(xt, h, c, wih, whh, bih, bhh):
        g = xt @ wih.T + h @ whh.T + bih + bhh
        i = jax.nn.sigmoid(g[:, :H]); f = jax.nn.sigmoid(g[:, H:2 * H])
        gg = jnp.tanh(g[:, 2 * H:3 * H]); o = jax.nn.sigmoid(g[:, 3 * H:])
        c = f * c + i * gg
        return o * jnp.tanh(c), c

    h0 = c0 = h1 = c1 = jnp.zeros((B, H), jnp.float32)
    for t in range(feat.shape[1]):
        h0, c0 = cell(feat[:, t, :], h0, c0, params["w_ih0"], params["w_hh0"],
                      params["b_ih0"], params["b_hh0"])
        h1, c1 = cell(h0, h1, c1, params["w_ih1"], params["w_hh1"],
                      params["b_ih1"], params["b_hh1"])
    return jax.nn.sigmoid(h1 @ params["fc_w"].T + params["fc_b"])


if __name__ == "__main__":
    # Module hyper-parameters: input_size=4, hidden_size=32, kernel_size=3,
    # num_layers=2, dropout=0.0 (identity at inference).
    B, L, INPUT, KSZ, H = 2, 16, 4, 3, 32

    key = jax.random.PRNGKey(0)
    keys = jax.random.split(key, 16)

    def init(k, shape, scale=0.1):
        return (scale * jax.random.normal(k, shape)).astype(jnp.float32)

    params = {
        "w1": init(keys[0], (64, INPUT, KSZ)),  "b1": init(keys[1], (64,)),
        "w2": init(keys[2], (128, 64, 3)),      "b2": init(keys[3], (128,)),
        "w_ih0": init(keys[4], (4 * H, 128)),   "w_hh0": init(keys[5], (4 * H, H)),
        "b_ih0": init(keys[6], (4 * H,)),       "b_hh0": init(keys[7], (4 * H,)),
        "w_ih1": init(keys[8], (4 * H, H)),     "w_hh1": init(keys[9], (4 * H, H)),
        "b_ih1": init(keys[10], (4 * H,)),      "b_hh1": init(keys[11], (4 * H,)),
        "fc_w": init(keys[12], (1, H)),         "fc_b": init(keys[13], (1,)),
    }
    x = jax.random.normal(keys[14], (B, L, INPUT), dtype=jnp.float32)

    fwd = jax.jit(cnn_lstm_forward)
    out = jax.block_until_ready(fwd(x, params))
    assert out.shape == (B, 1), out.shape

    ref = jax.block_until_ready(reference_forward(x, params))
    np.testing.assert_allclose(np.asarray(out), np.asarray(ref), rtol=2e-2, atol=2e-2)

    print("KERNEL_OK")
</pallas_src>

<mosaic_0001>
module attributes {stable_mosaic.version = 11 : i64} {
  func.func @cnn_lstm_kernel(%arg0: memref<2x16x12xf32, #tpu.memory_space<vmem>>, %arg1: memref<12x64xf32, #tpu.memory_space<vmem>>, %arg2: memref<1x64xf32, #tpu.memory_space<vmem>>, %arg3: memref<192x128xf32, #tpu.memory_space<vmem>>, %arg4: memref<1x128xf32, #tpu.memory_space<vmem>>, %arg5: memref<128x128xf32, #tpu.memory_space<vmem>>, %arg6: memref<32x128xf32, #tpu.memory_space<vmem>>, %arg7: memref<1x128xf32, #tpu.memory_space<vmem>>, %arg8: memref<32x128xf32, #tpu.memory_space<vmem>>, %arg9: memref<32x128xf32, #tpu.memory_space<vmem>>, %arg10: memref<1x128xf32, #tpu.memory_space<vmem>>, %arg11: memref<32x1xf32, #tpu.memory_space<vmem>>, %arg12: memref<1x1xf32, #tpu.memory_space<vmem>>, %arg13: memref<2x1xf32, #tpu.memory_space<vmem>>) attributes {dimension_semantics = [], scalar_prefetch = 0 : i64, scratch_operands = 0 : i64, tpu.core_type = #tpu.core_type<tc>} {
    %c0 = arith.constant 0 : index
    %c0_0 = arith.constant 0 : index
    %c0_1 = arith.constant 0 : index
    %0 = vector.load %arg0[%c0, %c0_0, %c0_1] : memref<2x16x12xf32, #tpu.memory_space<vmem>>, vector<2x16x12xf32>
    %1 = vector.shape_cast %0 : vector<2x16x12xf32> to vector<32x12xf32>
    %c0_2 = arith.constant 0 : index
    %c0_3 = arith.constant 0 : index
    %2 = vector.load %arg1[%c0_2, %c0_3] : memref<12x64xf32, #tpu.memory_space<vmem>>, vector<12x64xf32>
    %cst = arith.constant dense<0.000000e+00> : vector<32x64xf32>
    %3 = tpu.matmul %1, %2, %cst {dimension_numbers = #tpu.dot_dimension_numbers<[1], [0], [0], [1], [0, 0, 1, 1], [], []>} : vector<32x12xf32>, vector<12x64xf32>, vector<32x64xf32> -> vector<32x64xf32>
    %c0_4 = arith.constant 0 : index
    %c0_5 = arith.constant 0 : index
    %4 = vector.load %arg2[%c0_4, %c0_5] : memref<1x64xf32, #tpu.memory_space<vmem>>, vector<1x64xf32>
    %5 = vector.broadcast %4 : vector<1x64xf32> to vector<32x64xf32>
    %6 = arith.addf %3, %5 : vector<32x64xf32>
    %cst_6 = arith.constant 0.000000e+00 : f32
    %7 = vector.broadcast %cst_6 : f32 to vector<32x64xf32>
    %8 = arith.maximumf %6, %7 : vector<32x64xf32>
    %9 = vector.shape_cast %8 : vector<32x64xf32> to vector<2x8x2x64xf32>
    %cst_7 = arith.constant dense<0xFF800000> : vector<2x8x64xf32>
    %10 = vector.multi_reduction <maximumf>, %9, %cst_7 [2] : vector<2x8x2x64xf32> to vector<2x8x64xf32>
    %cst_8 = arith.constant 0.000000e+00 : f32
    %11 = vector.broadcast %cst_8 : f32 to vector<2x1x64xf32>
    %12 = tpu.concatenate %11, %10, %11 in 1 : vector<2x1x64xf32>, vector<2x8x64xf32>, vector<2x1x64xf32> -> vector<2x10x64xf32>
    %13 = vector.extract_strided_slice %12 {offsets = [0, 0, 0], sizes = [2, 8, 64], strides = [1, 1, 1]} : vector<2x10x64xf32> to vector<2x8x64xf32>
    %14 = vector.shape_cast %13 : vector<2x8x64xf32> to vector<16x64xf32>
    %15 = vector.extract_strided_slice %12 {offsets = [0, 1, 0], sizes = [2, 8, 64], strides = [1, 1, 1]} : vector<2x10x64xf32> to vector<2x8x64xf32>
    %16 = vector.shape_cast %15 : vector<2x8x64xf32> to vector<16x64xf32>
    %17 = vector.extract_strided_slice %12 {offsets = [0, 2, 0], sizes = [2, 8, 64], strides = [1, 1, 1]} : vector<2x10x64xf32> to vector<2x8x64xf32>
    %18 = vector.shape_cast %17 : vector<2x8x64xf32> to vector<16x64xf32>
    %19 = tpu.concatenate %14, %16, %18 in 1 : vector<16x64xf32>, vector<16x64xf32>, vector<16x64xf32> -> vector<16x192xf32>
    %c0_9 = arith.constant 0 : index
    %c0_10 = arith.constant 0 : index
    %20 = vector.load %arg3[%c0_9, %c0_10] : memref<192x128xf32, #tpu.memory_space<vmem>>, vector<192x128xf32>
    %cst_11 = arith.constant dense<0.000000e+00> : vector<16x128xf32>
    %21 = tpu.matmul %19, %20, %cst_11 {dimension_numbers = #tpu.dot_dimension_numbers<[1], [0], [0], [1], [0, 0, 1, 1], [], []>} : vector<16x192xf32>, vector<192x128xf32>, vector<16x128xf32> -> vector<16x128xf32>
    %c0_12 = arith.constant 0 : index
    %c0_13 = arith.constant 0 : index
    %22 = vector.load %arg4[%c0_12, %c0_13] : memref<1x128xf32, #tpu.memory_space<vmem>>, vector<1x128xf32>
    %23 = vector.broadcast %22 : vector<1x128xf32> to vector<16x128xf32>
    %24 = arith.addf %21, %23 : vector<16x128xf32>
    %cst_14 = arith.constant 0.000000e+00 : f32
    %25 = vector.broadcast %cst_14 : f32 to vector<16x128xf32>
    %26 = arith.maximumf %24, %25 : vector<16x128xf32>
    %27 = vector.shape_cast %26 : vector<16x128xf32> to vector<2x4x2x128xf32>
    %cst_15 = arith.constant dense<0xFF800000> : vector<2x4x128xf32>
    %28 = vector.multi_reduction <maximumf>, %27, %cst_15 [2] : vector<2x4x2x128xf32> to vector<2x4x128xf32>
    %29 = vector.shape_cast %28 : vector<2x4x128xf32> to vector<8x128xf32>
    %c0_16 = arith.constant 0 : index
    %c0_17 = arith.constant 0 : index
    %30 = vector.load %arg5[%c0_16, %c0_17] : memref<128x128xf32, #tpu.memory_space<vmem>>, vector<128x128xf32>
    %cst_18 = arith.constant dense<0.000000e+00> : vector<8x128xf32>
    %31 = tpu.matmul %29, %30, %cst_18 {dimension_numbers = #tpu.dot_dimension_numbers<[1], [0], [0], [1], [0, 0, 1, 1], [], []>} : vector<8x128xf32>, vector<128x128xf32>, vector<8x128xf32> -> vector<8x128xf32>
    %c0_19 = arith.constant 0 : index
    %c0_20 = arith.constant 0 : index
    %32 = vector.load %arg7[%c0_19, %c0_20] : memref<1x128xf32, #tpu.memory_space<vmem>>, vector<1x128xf32>
    %33 = vector.broadcast %32 : vector<1x128xf32> to vector<8x128xf32>
    %34 = arith.addf %31, %33 : vector<8x128xf32>
    %35 = vector.shape_cast %34 : vector<8x128xf32> to vector<2x4x128xf32>
    %c0_21 = arith.constant 0 : index
    %c0_22 = arith.constant 0 : index
    %36 = vector.load %arg6[%c0_21, %c0_22] : memref<32x128xf32, #tpu.memory_space<vmem>>, vector<32x128xf32>
    %c0_23 = arith.constant 0 : index
    %c0_24 = arith.constant 0 : index
    %37 = vector.load %arg8[%c0_23, %c0_24] : memref<32x128xf32, #tpu.memory_space<vmem>>, vector<32x128xf32>
    %c0_25 = arith.constant 0 : index
    %c0_26 = arith.constant 0 : index
    %38 = vector.load %arg9[%c0_25, %c0_26] : memref<32x128xf32, #tpu.memory_space<vmem>>, vector<32x128xf32>
    %c0_27 = arith.constant 0 : index
    %c0_28 = arith.constant 0 : index
    %39 = vector.load %arg10[%c0_27, %c0_28] : memref<1x128xf32, #tpu.memory_space<vmem>>, vector<1x128xf32>
    %cst_29 = arith.constant 0.000000e+00 : f32
    %40 = vector.broadcast %cst_29 : f32 to vector<2x32xf32>
    %cst_30 = arith.constant 0.000000e+00 : f32
    %41 = vector.broadcast %cst_30 : f32 to vector<2x32xf32>
    %cst_31 = arith.constant 0.000000e+00 : f32
    %42 = vector.broadcast %cst_31 : f32 to vector<2x32xf32>
    %cst_32 = arith.constant 0.000000e+00 : f32
    %43 = vector.broadcast %cst_32 : f32 to vector<2x32xf32>
    %44 = vector.extract_strided_slice %35 {offsets = [0, 0, 0], sizes = [2, 1, 128], strides = [1, 1, 1]} : vector<2x4x128xf32> to vector<2x1x128xf32>
    %45 = vector.shape_cast %44 : vector<2x1x128xf32> to vector<2x128xf32>
    %cst_33 = arith.constant dense<0.000000e+00> : vector<2x128xf32>
    %46 = tpu.matmul %40, %36, %cst_33 {dimension_numbers = #tpu.dot_dimension_numbers<[1], [0], [0], [1], [0, 0, 1, 1], [], []>} : vector<2x32xf32>, vector<32x128xf32>, vector<2x128xf32> -> vector<2x128xf32>
    %47 = arith.addf %45, %46 : vector<2x128xf32>
    %48 = arith.negf %47 : vector<2x128xf32>
    %49 = math.exp %48 : vector<2x128xf32>
    %cst_34 = arith.constant 1.000000e+00 : f32
    %50 = vector.broadcast %cst_34 : f32 to vector<2x128xf32>
    %51 = arith.addf %50, %49 : vector<2x128xf32>
    %52 = arith.divf %50, %51 : vector<2x128xf32>
    %53 = math.tanh %47 : vector<2x128xf32>
    %54 = vector.extract_strided_slice %52 {offsets = [0, 0], sizes = [2, 32], strides = [1, 1]} : vector<2x128xf32> to vector<2x32xf32>
    %55 = vector.extract_strided_slice %52 {offsets = [0, 32], sizes = [2, 32], strides = [1, 1]} : vector<2x128xf32> to vector<2x32xf32>
    %56 = vector.extract_strided_slice %53 {offsets = [0, 64], sizes = [2, 32], strides = [1, 1]} : vector<2x128xf32> to vector<2x32xf32>
    %57 = vector.extract_strided_slice %52 {offsets = [0, 96], sizes = [2, 32], strides = [1, 1]} : vector<2x128xf32> to vector<2x32xf32>
    %58 = arith.mulf %55, %41 : vector<2x32xf32>
    %59 = arith.mulf %54, %56 : vector<2x32xf32>
    %60 = arith.addf %58, %59 : vector<2x32xf32>
    %61 = math.tanh %60 : vector<2x32xf32>
    %62 = arith.mulf %57, %61 : vector<2x32xf32>
    %cst_35 = arith.constant dense<0.000000e+00> : vector<2x128xf32>
    %63 = tpu.matmul %62, %37, %cst_35 {dimension_numbers = #tpu.dot_dimension_numbers<[1], [0], [0], [1], [0, 0, 1, 1], [], []>} : vector<2x32xf32>, vector<32x128xf32>, vector<2x128xf32> -> vector<2x128xf32>
    %cst_36 = arith.constant dense<0.000000e+00> : vector<2x128xf32>
    %64 = tpu.matmul %42, %38, %cst_36 {dimension_numbers = #tpu.dot_dimension_numbers<[1], [0], [0], [1], [0, 0, 1, 1], [], []>} : vector<2x32xf32>, vector<32x128xf32>, vector<2x128xf32> -> vector<2x128xf32>
    %65 = arith.addf %63, %64 : vector<2x128xf32>
    %66 = vector.broadcast %39 : vector<1x128xf32> to vector<2x128xf32>
    %67 = arith.addf %65, %66 : vector<2x128xf32>
    %68 = arith.negf %67 : vector<2x128xf32>
    %69 = math.exp %68 : vector<2x128xf32>
    %cst_37 = arith.constant 1.000000e+00 : f32
    %70 = vector.broadcast %cst_37 : f32 to vector<2x128xf32>
    %71 = arith.addf %70, %69 : vector<2x128xf32>
    %72 = arith.divf %70, %71 : vector<2x128xf32>
    %73 = math.tanh %67 : vector<2x128xf32>
    %74 = vector.extract_strided_slice %72 {offsets = [0, 0], sizes = [2, 32], strides = [1, 1]} : vector<2x128xf32> to vector<2x32xf32>
    %75 = vector.extract_strided_slice %72 {offsets = [0, 32], sizes = [2, 32], strides = [1, 1]} : vector<2x128xf32> to vector<2x32xf32>
    %76 = vector.extract_strided_slice %73 {offsets = [0, 64], sizes = [2, 32], strides = [1, 1]} : vector<2x128xf32> to vector<2x32xf32>
    %77 = vector.extract_strided_slice %72 {offsets = [0, 96], sizes = [2, 32], strides = [1, 1]} : vector<2x128xf32> to vector<2x32xf32>
    %78 = arith.mulf %75, %43 : vector<2x32xf32>
    %79 = arith.mulf %74, %76 : vector<2x32xf32>
    %80 = arith.addf %78, %79 : vector<2x32xf32>
    %81 = math.tanh %80 : vector<2x32xf32>
    %82 = arith.mulf %77, %81 : vector<2x32xf32>
    %83 = vector.extract_strided_slice %35 {offsets = [0, 1, 0], sizes = [2, 1, 128], strides = [1, 1, 1]} : vector<2x4x128xf32> to vector<2x1x128xf32>
    %84 = vector.shape_cast %83 : vector<2x1x128xf32> to vector<2x128xf32>
    %cst_38 = arith.constant dense<0.000000e+00> : vector<2x128xf32>
    %85 = tpu.matmul %62, %36, %cst_38 {dimension_numbers = #tpu.dot_dimension_numbers<[1], [0], [0], [1], [0, 0, 1, 1], [], []>} : vector<2x32xf32>, vector<32x128xf32>, vector<2x128xf32> -> vector<2x128xf32>
    %86 = arith.addf %84, %85 : vector<2x128xf32>
    %87 = arith.negf %86 : vector<2x128xf32>
    %88 = math.exp %87 : vector<2x128xf32>
    %cst_39 = arith.constant 1.000000e+00 : f32
    %89 = vector.broadcast %cst_39 : f32 to vector<2x128xf32>
    %90 = arith.addf %89, %88 : vector<2x128xf32>
    %91 = arith.divf %89, %90 : vector<2x128xf32>
    %92 = math.tanh %86 : vector<2x128xf32>
    %93 = vector.extract_strided_slice %91 {offsets = [0, 0], sizes = [2, 32], strides = [1, 1]} : vector<2x128xf32> to vector<2x32xf32>
    %94 = vector.extract_strided_slice %91 {offsets = [0, 32], sizes = [2, 32], strides = [1, 1]} : vector<2x128xf32> to vector<2x32xf32>
    %95 = vector.extract_strided_slice %92 {offsets = [0, 64], sizes = [2, 32], strides = [1, 1]} : vector<2x128xf32> to vector<2x32xf32>
    %96 = vector.extract_strided_slice %91 {offsets = [0, 96], sizes = [2, 32], strides = [1, 1]} : vector<2x128xf32> to vector<2x32xf32>
    %97 = arith.mulf %94, %60 : vector<2x32xf32>
    %98 = arith.mulf %93, %95 : vector<2x32xf32>
    %99 = arith.addf %97, %98 : vector<2x32xf32>
    %100 = math.tanh %99 : vector<2x32xf32>
    %101 = arith.mulf %96, %100 : vector<2x32xf32>
    %cst_40 = arith.constant dense<0.000000e+00> : vector<2x128xf32>
    %102 = tpu.matmul %101, %37, %cst_40 {dimension_numbers = #tpu.dot_dimension_numbers<[1], [0], [0], [1], [0, 0, 1, 1], [], []>} : vector<2x32xf32>, vector<32x128xf32>, vector<2x128xf32> -> vector<2x128xf32>
    %cst_41 = arith.constant dense<0.000000e+00> : vector<2x128xf32>
    %103 = tpu.matmul %82, %38, %cst_41 {dimension_numbers = #tpu.dot_dimension_numbers<[1], [0], [0], [1], [0, 0, 1, 1], [], []>} : vector<2x32xf32>, vector<32x128xf32>, vector<2x128xf32> -> vector<2x128xf32>
    %104 = arith.addf %102, %103 : vector<2x128xf32>
    %105 = vector.broadcast %39 : vector<1x128xf32> to vector<2x128xf32>
    %106 = arith.addf %104, %105 : vector<2x128xf32>
    %107 = arith.negf %106 : vector<2x128xf32>
    %108 = math.exp %107 : vector<2x128xf32>
    %cst_42 = arith.constant 1.000000e+00 : f32
    %109 = vector.broadcast %cst_42 : f32 to vector<2x128xf32>
    %110 = arith.addf %109, %108 : vector<2x128xf32>
    %111 = arith.divf %109, %110 : vector<2x128xf32>
    %112 = math.tanh %106 : vector<2x128xf32>
    %113 = vector.extract_strided_slice %111 {offsets = [0, 0], sizes = [2, 32], strides = [1, 1]} : vector<2x128xf32> to vector<2x32xf32>
    %114 = vector.extract_strided_slice %111 {offsets = [0, 32], sizes = [2, 32], strides = [1, 1]} : vector<2x128xf32> to vector<2x32xf32>
    %115 = vector.extract_strided_slice %112 {offsets = [0, 64], sizes = [2, 32], strides = [1, 1]} : vector<2x128xf32> to vector<2x32xf32>
    %116 = vector.extract_strided_slice %111 {offsets = [0, 96], sizes = [2, 32], strides = [1, 1]} : vector<2x128xf32> to vector<2x32xf32>
    %117 = arith.mulf %114, %80 : vector<2x32xf32>
    %118 = arith.mulf %113, %115 : vector<2x32xf32>
    %119 = arith.addf %117, %118 : vector<2x32xf32>
    %120 = math.tanh %119 : vector<2x32xf32>
    %121 = arith.mulf %116, %120 : vector<2x32xf32>
    %122 = vector.extract_strided_slice %35 {offsets = [0, 2, 0], sizes = [2, 1, 128], strides = [1, 1, 1]} : vector<2x4x128xf32> to vector<2x1x128xf32>
    %123 = vector.shape_cast %122 : vector<2x1x128xf32> to vector<2x128xf32>
    %cst_43 = arith.constant dense<0.000000e+00> : vector<2x128xf32>
    %124 = tpu.matmul %101, %36, %cst_43 {dimension_numbers = #tpu.dot_dimension_numbers<[1], [0], [0], [1], [0, 0, 1, 1], [], []>} : vector<2x32xf32>, vector<32x128xf32>, vector<2x128xf32> -> vector<2x128xf32>
    %125 = arith.addf %123, %124 : vector<2x128xf32>
    %126 = arith.negf %125 : vector<2x128xf32>
    %127 = math.exp %126 : vector<2x128xf32>
    %cst_44 = arith.constant 1.000000e+00 : f32
    %128 = vector.broadcast %cst_44 : f32 to vector<2x128xf32>
    %129 = arith.addf %128, %127 : vector<2x128xf32>
    %130 = arith.divf %128, %129 : vector<2x128xf32>
    %131 = math.tanh %125 : vector<2x128xf32>
    %132 = vector.extract_strided_slice %130 {offsets = [0, 0], sizes = [2, 32], strides = [1, 1]} : vector<2x128xf32> to vector<2x32xf32>
    %133 = vector.extract_strided_slice %130 {offsets = [0, 32], sizes = [2, 32], strides = [1, 1]} : vector<2x128xf32> to vector<2x32xf32>
    %134 = vector.extract_strided_slice %131 {offsets = [0, 64], sizes = [2, 32], strides = [1, 1]} : vector<2x128xf32> to vector<2x32xf32>
    %135 = vector.extract_strided_slice %130 {offsets = [0, 96], sizes = [2, 32], strides = [1, 1]} : vector<2x128xf32> to vector<2x32xf32>
    %136 = arith.mulf %133, %99 : vector<2x32xf32>
    %137 = arith.mulf %132, %134 : vector<2x32xf32>
    %138 = arith.addf %136, %137 : vector<2x32xf32>
    %139 = math.tanh %138 : vector<2x32xf32>
    %140 = arith.mulf %135, %139 : vector<2x32xf32>
    %cst_45 = arith.constant dense<0.000000e+00> : vector<2x128xf32>
    %141 = tpu.matmul %140, %37, %cst_45 {dimension_numbers = #tpu.dot_dimension_numbers<[1], [0], [0], [1], [0, 0, 1, 1], [], []>} : vector<2x32xf32>, vector<32x128xf32>, vector<2x128xf32> -> vector<2x128xf32>
    %cst_46 = arith.constant dense<0.000000e+00> : vector<2x128xf32>
    %142 = tpu.matmul %121, %38, %cst_46 {dimension_numbers = #tpu.dot_dimension_numbers<[1], [0], [0], [1], [0, 0, 1, 1], [], []>} : vector<2x32xf32>, vector<32x128xf32>, vector<2x128xf32> -> vector<2x128xf32>
    %143 = arith.addf %141, %142 : vector<2x128xf32>
    %144 = vector.broadcast %39 : vector<1x128xf32> to vector<2x128xf32>
    %145 = arith.addf %143, %144 : vector<2x128xf32>
    %146 = arith.negf %145 : vector<2x128xf32>
    %147 = math.exp %146 : vector<2x128xf32>
    %cst_47 = arith.constant 1.000000e+00 : f32
    %148 = vector.broadcast %cst_47 : f32 to vector<2x128xf32>
    %149 = arith.addf %148, %147 : vector<2x128xf32>
    %150 = arith.divf %148, %149 : vector<2x128xf32>
    %151 = math.tanh %145 : vector<2x128xf32>
    %152 = vector.extract_strided_slice %150 {offsets = [0, 0], sizes = [2, 32], strides = [1, 1]} : vector<2x128xf32> to vector<2x32xf32>
    %153 = vector.extract_strided_slice %150 {offsets = [0, 32], sizes = [2, 32], strides = [1, 1]} : vector<2x128xf32> to vector<2x32xf32>
    %154 = vector.extract_strided_slice %151 {offsets = [0, 64], sizes = [2, 32], strides = [1, 1]} : vector<2x128xf32> to vector<2x32xf32>
    %155 = vector.extract_strided_slice %150 {offsets = [0, 96], sizes = [2, 32], strides = [1, 1]} : vector<2x128xf32> to vector<2x32xf32>
    %156 = arith.mulf %153, %119 : vector<2x32xf32>
    %157 = arith.mulf %152, %154 : vector<2x32xf32>
    %158 = arith.addf %156, %157 : vector<2x32xf32>
    %159 = math.tanh %158 : vector<2x32xf32>
    %160 = arith.mulf %155, %159 : vector<2x32xf32>
    %161 = vector.extract_strided_slice %35 {offsets = [0, 3, 0], sizes = [2, 1, 128], strides = [1, 1, 1]} : vector<2x4x128xf32> to vector<2x1x128xf32>
    %162 = vector.shape_cast %161 : vector<2x1x128xf32> to vector<2x128xf32>
    %cst_48 = arith.constant dense<0.000000e+00> : vector<2x128xf32>
    %163 = tpu.matmul %140, %36, %cst_48 {dimension_numbers = #tpu.dot_dimension_numbers<[1], [0], [0], [1], [0, 0, 1, 1], [], []>} : vector<2x32xf32>, vector<32x128xf32>, vector<2x128xf32> -> vector<2x128xf32>
    %164 = arith.addf %162, %163 : vector<2x128xf32>
    %165 = arith.negf %164 : vector<2x128xf32>
    %166 = math.exp %165 : vector<2x128xf32>
    %cst_49 = arith.constant 1.000000e+00 : f32
    %167 = vector.broadcast %cst_49 : f32 to vector<2x128xf32>
    %168 = arith.addf %167, %166 : vector<2x128xf32>
    %169 = arith.divf %167, %168 : vector<2x128xf32>
    %170 = math.tanh %164 : vector<2x128xf32>
    %171 = vector.extract_strided_slice %169 {offsets = [0, 0], sizes = [2, 32], strides = [1, 1]} : vector<2x128xf32> to vector<2x32xf32>
    %172 = vector.extract_strided_slice %169 {offsets = [0, 32], sizes = [2, 32], strides = [1, 1]} : vector<2x128xf32> to vector<2x32xf32>
    %173 = vector.extract_strided_slice %170 {offsets = [0, 64], sizes = [2, 32], strides = [1, 1]} : vector<2x128xf32> to vector<2x32xf32>
    %174 = vector.extract_strided_slice %169 {offsets = [0, 96], sizes = [2, 32], strides = [1, 1]} : vector<2x128xf32> to vector<2x32xf32>
    %175 = arith.mulf %172, %138 : vector<2x32xf32>
    %176 = arith.mulf %171, %173 : vector<2x32xf32>
    %177 = arith.addf %175, %176 : vector<2x32xf32>
    %178 = math.tanh %177 : vector<2x32xf32>
    %179 = arith.mulf %174, %178 : vector<2x32xf32>
    %cst_50 = arith.constant dense<0.000000e+00> : vector<2x128xf32>
    %180 = tpu.matmul %179, %37, %cst_50 {dimension_numbers = #tpu.dot_dimension_numbers<[1], [0], [0], [1], [0, 0, 1, 1], [], []>} : vector<2x32xf32>, vector<32x128xf32>, vector<2x128xf32> -> vector<2x128xf32>
    %cst_51 = arith.constant dense<0.000000e+00> : vector<2x128xf32>
    %181 = tpu.matmul %160, %38, %cst_51 {dimension_numbers = #tpu.dot_dimension_numbers<[1], [0], [0], [1], [0, 0, 1, 1], [], []>} : vector<2x32xf32>, vector<32x128xf32>, vector<2x128xf32> -> vector<2x128xf32>
    %182 = arith.addf %180, %181 : vector<2x128xf32>
    %183 = vector.broadcast %39 : vector<1x128xf32> to vector<2x128xf32>
    %184 = arith.addf %182, %183 : vector<2x128xf32>
    %185 = arith.negf %184 : vector<2x128xf32>
    %186 = math.exp %185 : vector<2x128xf32>
    %cst_52 = arith.constant 1.000000e+00 : f32
    %187 = vector.broadcast %cst_52 : f32 to vector<2x128xf32>
    %188 = arith.addf %187, %186 : vector<2x128xf32>
    %189 = arith.divf %187, %188 : vector<2x128xf32>
    %190 = math.tanh %184 : vector<2x128xf32>
    %191 = vector.extract_strided_slice %189 {offsets = [0, 0], sizes = [2, 32], strides = [1, 1]} : vector<2x128xf32> to vector<2x32xf32>
    %192 = vector.extract_strided_slice %189 {offsets = [0, 32], sizes = [2, 32], strides = [1, 1]} : vector<2x128xf32> to vector<2x32xf32>
    %193 = vector.extract_strided_slice %190 {offsets = [0, 64], sizes = [2, 32], strides = [1, 1]} : vector<2x128xf32> to vector<2x32xf32>
    %194 = vector.extract_strided_slice %189 {offsets = [0, 96], sizes = [2, 32], strides = [1, 1]} : vector<2x128xf32> to vector<2x32xf32>
    %195 = arith.mulf %192, %158 : vector<2x32xf32>
    %196 = arith.mulf %191, %193 : vector<2x32xf32>
    %197 = arith.addf %195, %196 : vector<2x32xf32>
    %198 = math.tanh %197 : vector<2x32xf32>
    %199 = arith.mulf %194, %198 : vector<2x32xf32>
    %c0_53 = arith.constant 0 : index
    %c0_54 = arith.constant 0 : index
    %200 = vector.load %arg11[%c0_53, %c0_54] : memref<32x1xf32, #tpu.memory_space<vmem>>, vector<32x1xf32>
    %cst_55 = arith.constant dense<0.000000e+00> : vector<2x1xf32>
    %201 = tpu.matmul %199, %200, %cst_55 {dimension_numbers = #tpu.dot_dimension_numbers<[1], [0], [0], [1], [0, 0, 1, 1], [], []>} : vector<2x32xf32>, vector<32x1xf32>, vector<2x1xf32> -> vector<2x1xf32>
    %c0_56 = arith.constant 0 : index
    %c0_57 = arith.constant 0 : index
    %202 = vector.load %arg12[%c0_56, %c0_57] : memref<1x1xf32, #tpu.memory_space<vmem>>, vector<1x1xf32>
    %203 = vector.broadcast %202 : vector<1x1xf32> to vector<2x1xf32>
    %204 = arith.addf %201, %203 : vector<2x1xf32>
    %205 = arith.negf %204 : vector<2x1xf32>
    %206 = math.exp %205 : vector<2x1xf32>
    %cst_58 = arith.constant 1.000000e+00 : f32
    %207 = vector.broadcast %cst_58 : f32 to vector<2x1xf32>
    %208 = arith.addf %207, %206 : vector<2x1xf32>
    %209 = arith.divf %207, %208 : vector<2x1xf32>
    %c0_59 = arith.constant 0 : index
    %c0_60 = arith.constant 0 : index
    %210 = vector.load %arg13[%c0_59, %c0_60] : memref<2x1xf32, #tpu.memory_space<vmem>>, vector<2x1xf32>
    tpu.vector_store %arg13[%c0_59, %c0_60], %209 {strides = array<i32>} : memref<2x1xf32, #tpu.memory_space<vmem>>, vector<2x1xf32>,
    return
  }
}

</mosaic_0001>

<llo_original>
// kernel: cnn_lstm_forward.1
$region0: #{cnn_lstm_forward.1}
  #allocation0 [shape = 'u32[]', space=smem, size = 0x4, offset = 0x4, fixed_abs, tag = 'smem constant byte address 0x4 - core index']
  #allocation1 [shape = 'u32[144,128]{1,0:T(1,128)}', space=vmem, size = 0x12000, scoped, tag = 'internal scratch']
  #allocation2 [shape = 'f32[1,1]{1,0:T(1,128)S(1)}', space=vmem, size = 0x200, scoped, tag = 'scoped memory for cnn_lstm_forward.1']
  %s0 = inlined_call_operand.vmem [shape: f32[2,16,12], index: 0, kind: input, shape index: {}]
  %s1 = inlined_call_operand.vmem [shape: f32[12,64], index: 1, kind: input, shape index: {}]
  %s2 = inlined_call_operand.vmem [shape: f32[1,64], index: 2, kind: input, shape index: {}]
  %s3 = inlined_call_operand.vmem [shape: f32[192,128], index: 3, kind: input, shape index: {}]
  %s4 = inlined_call_operand.vmem [shape: f32[1,128], index: 4, kind: input, shape index: {}]
  %s5 = inlined_call_operand.vmem [shape: f32[128,128], index: 5, kind: input, shape index: {}]
  %s6 = inlined_call_operand.vmem [shape: f32[32,128], index: 6, kind: input, shape index: {}]
  %s7 = inlined_call_operand.vmem [shape: f32[1,128], index: 7, kind: input, shape index: {}]
  %s8 = inlined_call_operand.vmem [shape: f32[32,128], index: 8, kind: input, shape index: {}]
  %s9 = inlined_call_operand.vmem [shape: f32[32,128], index: 9, kind: input, shape index: {}]
  %s10 = inlined_call_operand.vmem [shape: f32[1,128], index: 10, kind: input, shape index: {}]
  %s11 = inlined_call_operand.vmem [shape: f32[32,1], index: 11, kind: input, shape index: {}]
  %s12 = inlined_call_operand.<no memory space> [shape: f32[1,1], index: 12, kind: input, shape index: {}]
  %s13 = inlined_call_operand.vmem [shape: f32[2,1], index: 13, kind: output, shape index: {}]
  %s14 = sld [smem:[#allocation0]]
  $region62: #{cnn_lstm_forward.1} parent=0
    _
  %s16 = ssub.s32 1, %s14
  %s17 = scalar_select 0, %s16, %s14
  %v18 = vstv %s12
  %19 = vst [vmem:[#allocation2] sm:$0x1] %v18
  // Predicated region
  $region2: #{cnn_lstm_forward.1} parent=0 // pred_check
    _
  $region3: #{cnn_lstm_forward.1} parent=0 // pred_check_branch
    %21 = sbr.rel (0) target = $region5
  $region4: #{cnn_lstm_forward.1} parent=0 // pred_region
    _
  $region5: #{cnn_lstm_forward.1} parent=0 // pred_fallthru
    _
  // Predicated region
  $region6: #{cnn_lstm_forward.1} parent=0 // pred_check
    _
  $region7: #{cnn_lstm_forward.1} parent=0 // pred_check_branch
    %23 = sbr.rel (0) target = $region9
  $region8: #{cnn_lstm_forward.1} parent=0 // pred_region
    _
  $region9: #{cnn_lstm_forward.1} parent=0 // pred_fallthru
    _
  // Predicated region
  $region10: #{cnn_lstm_forward.1} parent=0 // pred_check
    _
  $region11: #{cnn_lstm_forward.1} parent=0 // pred_check_branch
    %25 = sbr.rel (0) target = $region13
  $region12: #{cnn_lstm_forward.1} parent=0 // pred_region
    _
  $region13: #{cnn_lstm_forward.1} parent=0 // pred_fallthru
    _
  // Predicated region
  $region14: #{cnn_lstm_forward.1} parent=0 // pred_check
    _
  $region15: #{cnn_lstm_forward.1} parent=0 // pred_check_branch
    %27 = sbr.rel (0) target = $region17
  $region16: #{cnn_lstm_forward.1} parent=0 // pred_region
    _
  $region17: #{cnn_lstm_forward.1} parent=0 // pred_fallthru
    _
  // Predicated region
  $region18: #{cnn_lstm_forward.1} parent=0 // pred_check
    _
  $region19: #{cnn_lstm_forward.1} parent=0 // pred_check_branch
    %29 = sbr.rel (0) target = $region21
  $region20: #{cnn_lstm_forward.1} parent=0 // pred_region
    _
  $region21: #{cnn_lstm_forward.1} parent=0 // pred_fallthru
    _
  // Predicated region
  $region22: #{cnn_lstm_forward.1} parent=0 // pred_check
    _
  $region23: #{cnn_lstm_forward.1} parent=0 // pred_check_branch
    %31 = sbr.rel (0) target = $region25
  $region24: #{cnn_lstm_forward.1} parent=0 // pred_region
    _
  $region25: #{cnn_lstm_forward.1} parent=0 // pred_fallthru
    _
  // Predicated region
  $region26: #{cnn_lstm_forward.1} parent=0 // pred_check
    _
  $region27: #{cnn_lstm_forward.1} parent=0 // pred_check_branch
    %33 = sbr.rel (0) target = $region29
  $region28: #{cnn_lstm_forward.1} parent=0 // pred_region
    _
  $region29: #{cnn_lstm_forward.1} parent=0 // pred_fallthru
    _
  // Predicated region
  $region30: #{cnn_lstm_forward.1} parent=0 // pred_check
    _
  $region31: #{cnn_lstm_forward.1} parent=0 // pred_check_branch
    %35 = sbr.rel (0) target = $region33
  $region32: #{cnn_lstm_forward.1} parent=0 // pred_region
    _
  $region33: #{cnn_lstm_forward.1} parent=0 // pred_fallthru
    _
  // Predicated region
  $region34: #{cnn_lstm_forward.1} parent=0 // pred_check
    _
  $region35: #{cnn_lstm_forward.1} parent=0 // pred_check_branch
    %37 = sbr.rel (0) target = $region37
  $region36: #{cnn_lstm_forward.1} parent=0 // pred_region
    _
  $region37: #{cnn_lstm_forward.1} parent=0 // pred_fallthru
    _
  // Predicated region
  $region38: #{cnn_lstm_forward.1} parent=0 // pred_check
    _
  $region39: #{cnn_lstm_forward.1} parent=0 // pred_check_branch
    %39 = sbr.rel (0) target = $region41
  $region40: #{cnn_lstm_forward.1} parent=0 // pred_region
    _
  $region41: #{cnn_lstm_forward.1} parent=0 // pred_fallthru
    _
  // Predicated region
  $region42: #{cnn_lstm_forward.1} parent=0 // pred_check
    _
  $region43: #{cnn_lstm_forward.1} parent=0 // pred_check_branch
    %41 = sbr.rel (0) target = $region45
  $region44: #{cnn_lstm_forward.1} parent=0 // pred_region
    _
  $region45: #{cnn_lstm_forward.1} parent=0 // pred_fallthru
    _
  // Predicated region
  $region46: #{cnn_lstm_forward.1} parent=0 // pred_check
    _
  $region47: #{cnn_lstm_forward.1} parent=0 // pred_check_branch
    %43 = sbr.rel (0) target = $region49
  $region48: #{cnn_lstm_forward.1} parent=0 // pred_region
    _
  $region49: #{cnn_lstm_forward.1} parent=0 // pred_fallthru
    _
  // Predicated region
  $region50: #{cnn_lstm_forward.1} parent=0 // pred_check
    _
  $region51: #{cnn_lstm_forward.1} parent=0 // pred_check_branch
    %45 = sbr.rel (0) target = $region53
  $region52: #{cnn_lstm_forward.1} parent=0 // pred_region
    _
  $region53: #{cnn_lstm_forward.1} parent=0 // pred_fallthru
    _
  %v46 = vld [vmem:[%s0] sm:$0xff]
  %v47 = vld [vmem:[%s0 + $0x8] sm:$0xff]
  %v48 = vld [vmem:[%s0 + $0x10] sm:$0xff]
  %v49 = vld [vmem:[%s0 + $0x18] sm:$0xff]
  %v50 = vld [vmem:[%s1] sm:$0xff]
  %v51 = vld [vmem:[%s1 + $0x8] sm:$0xf]
  %v52 = vld [vmem:[%s2] sm:$0x1]
  %v54 = vlaneseq
  %v55 = vshrl.u32 %v54, 7
  %v56 = vsub.s32 0, %v55
  %v57 = vrot.slane %v52, %v56
  %vm59 = vcmask 97280
  %v61 = vsel %vm59, %v46, 0
  %v64 = vsel %vm59, %v47, 0
  %v67 = vsel %vm59, %v48, 0
  %v70 = vsel %vm59, %v49, 0
  %vm72 = vcmask 1043456
  %v74 = vsel %vm72, %v51, 0
  %76 = vmatprep.subr.mxu0 0.0
  %77 = vmatpush1.msra.mxu0 %v50
  %78 = vmatprep.subr.mxu0 0.0
  %79 = vmatpush1.msra.mxu0 %v74
  %80 = vmatprep.subr.mxu0 0.0
  %81 = vmatpush1.msra.mxu0 0.0
  %82 = vmatprep.subr.mxu0 0.0
  %83 = vmatpush1.msra.mxu0 0.0
  %84 = vmatprep.subr.mxu0 0.0
  %85 = vmatpush1.msra.mxu0 0.0
  %86 = vmatprep.subr.mxu0 0.0
  %87 = vmatpush1.msra.mxu0 0.0
  %88 = vmatprep.subr.mxu0 0.0
  %89 = vmatpush1.msra.mxu0 0.0
  %90 = vmatprep.subr.mxu0 0.0
  %91 = vmatpush1.msra.mxu0 0.0
  %92 = vmatprep.subr.mxu0 0.0
  %93 = vmatpush1.msra.mxu0 0.0
  %94 = vmatprep.subr.mxu0 0.0
  %95 = vmatpush1.msra.mxu0 0.0
  %96 = vmatprep.subr.mxu0 0.0
  %97 = vmatpush1.msra.mxu0 0.0
  %98 = vmatprep.subr.mxu0 0.0
  %99 = vmatpush1.msra.mxu0 0.0
  %100 = vmatprep.subr.mxu0 0.0
  %101 = vmatpush1.msra.mxu0 0.0
  %102 = vmatprep.subr.mxu0 0.0
  %103 = vmatpush1.msra.mxu0 0.0
  %104 = vmatprep.subr.mxu0 0.0
  %105 = vmatpush1.msra.mxu0 0.0
  %106 = vmatprep.subr.mxu0 0.0
  %107 = vmatpush1.msra.mxu0 0.0
  %108 = vmatprep.subr.mxu0 0.0
  %109 = vmatpush1.msra.mxu0 0.0
  %110 = vmatprep.subr.mxu0 0.0
  %111 = vmatpush1.msra.mxu0 0.0
  %112 = vmatprep.subr.mxu0 0.0
  %113 = vmatpush1.msra.mxu0 0.0
  %114 = vmatprep.subr.mxu0 0.0
  %115 = vmatpush1.msra.mxu0 0.0
  %116 = vmatprep.subr.mxu0 0.0
  %117 = vmatpush1.msra.mxu0 0.0
  %118 = vmatprep.subr.mxu0 0.0
  %119 = vmatpush1.msra.mxu0 0.0
  %120 = vmatprep.subr.mxu0 0.0
  %121 = vmatpush1.msra.mxu0 0.0
  %122 = vmatprep.subr.mxu0 0.0
  %123 = vmatpush1.msra.mxu0 0.0
  %124 = vmatprep.subr.mxu0 0.0
  %125 = vmatpush1.msra.mxu0 0.0
  %126 = vmatprep.subr.mxu0 0.0
  %127 = vmatpush1.msra.mxu0 0.0
  %128 = vmatprep.subr.mxu0 0.0
  %129 = vmatpush1.msra.mxu0 0.0
  %130 = vmatprep.subr.mxu0 0.0
  %131 = vmatpush1.msra.mxu0 0.0
  %132 = vmatprep.subr.mxu0 0.0
  %133 = vmatpush1.msra.mxu0 0.0
  %134 = vmatprep.subr.mxu0 0.0
  %135 = vmatpush1.msra.mxu0 0.0
  %136 = vmatprep.subr.mxu0 0.0
  %137 = vmatpush1.msra.mxu0 0.0
  %138 = vmatprep.subr.mxu0 0.0
  %139 = vmatpush1.msra.mxu0 0.0
  %140 = vmatprep.mubr.f32.mxu0 0.0
  %141 = vmatmul.mubr.f32.gmra.mrb[0].mxu0 %v61
  %v142 = vpop.f32.mrb[0].mxu0
  %v143 = vadd.f32 %v57, %v142
  %v144 = vpop.f32.mrb[0].mxu0
  %145 = vmatprep.mubr.f32.mxu0 0.0
  %146 = vmatmul.mubr.f32.gmra.mrb[0].mxu0 %v64
  %v147 = vpop.f32.mrb[0].mxu0
  %v148 = vadd.f32 %v57, %v147
  %v149 = vpop.f32.mrb[0].mxu0
  %150 = vmatprep.mubr.f32.mxu0 0.0
  %151 = vmatmul.mubr.f32.gmra.mrb[0].mxu0 %v67
  %v152 = vpop.f32.mrb[0].mxu0
  %v153 = vadd.f32 %v57, %v152
  %v154 = vpop.f32.mrb[0].mxu0
  %155 = vmatprep.mubr.f32.mxu0 0.0
  %156 = vmatmul.mubr.f32.gmra.mrb[0].mxu0 %v70
  %v157 = vpop.f32.mrb[0].mxu0
  %v158 = vadd.f32 %v57, %v157
  %v159 = vpop.f32.mrb[0].mxu0
  %160 = vdwg.mxu0
  %v161 = vmax.f32 %v143, 0.0
  %v162 = vmax.f32 %v148, 0.0
  %v163 = vmax.f32 %v153, 0.0
  %v164 = vmax.f32 %v158, 0.0
  %v169 = vcombine.high %v161, %v161
  %v171 = vunpack.c.l.s4 1983009808
  %v172 = vunpack.c.0.s8 %v171
  %v173 = vlaneseq
  %v174 = vshrl.u32 %v173, 7
  %v175 = vsub.s32 %v172, %v174
  %v176 = vrot.slane %v161, %v175
  %v178 = vunpack.c.l.s4 1983009808
  %v179 = vunpack.c.0.s8 %v178
  %v180 = vlaneseq
  %v181 = vshrl.u32 %v180, 7
  %v182 = vsub.s32 %v179, %v181
  %v183 = vrot.slane %v169, %v182
  %v184 = vcombine.high %v176, %v176
  %v185 = vcombine.high %v183, %v183
  %v186 = vcombine.high %v162, %v162
  %v188 = vunpack.c.l.s4 1983009808
  %v189 = vunpack.c.0.s8 %v188
  %v190 = vlaneseq
  %v191 = vshrl.u32 %v190, 7
  %v192 = vsub.s32 %v189, %v191
  %v193 = vrot.slane %v162, %v192
  %v195 = vunpack.c.l.s4 1983009808
  %v196 = vunpack.c.0.s8 %v195
  %v197 = vlaneseq
  %v198 = vshrl.u32 %v197, 7
  %v199 = vsub.s32 %v196, %v198
  %v200 = vrot.slane %v186, %v199
  %v201 = vcombine.high %v193, %v193
  %v202 = vcombine.high %v200, %v200
  %v203 = vcombine.high %v163, %v163
  %v205 = vunpack.c.l.s4 1983009808
  %v206 = vunpack.c.0.s8 %v205
  %v207 = vlaneseq
  %v208 = vshrl.u32 %v207, 7
  %v209 = vsub.s32 %v206, %v208
  %v210 = vrot.slane %v163, %v209
  %v212 = vunpack.c.l.s4 1983009808
  %v213 = vunpack.c.0.s8 %v212
  %v214 = vlaneseq
  %v215 = vshrl.u32 %v214, 7
  %v216 = vsub.s32 %v213, %v215
  %v217 = vrot.slane %v203, %v216
  %v218 = vcombine.high %v210, %v210
  %v219 = vcombine.high %v217, %v217
  %v220 = vcombine.high %v164, %v164
  %v222 = vunpack.c.l.s4 1983009808
  %v223 = vunpack.c.0.s8 %v222
  %v224 = vlaneseq
  %v225 = vshrl.u32 %v224, 7
  %v226 = vsub.s32 %v223, %v225
  %v227 = vrot.slane %v164, %v226
  %v229 = vunpack.c.l.s4 1983009808
  %v230 = vunpack.c.0.s8 %v229
  %v231 = vlaneseq
  %v232 = vshrl.u32 %v231, 7
  %v233 = vsub.s32 %v230, %v232
  %v234 = vrot.slane %v220, %v233
  %v235 = vcombine.high %v227, %v227
  %v236 = vcombine.high %v234, %v234
  %vm253 = vcmask 517120
  %v254 = vsel %vm253, %v176, -inf
  %v255 = vrot.slane %v254, 4
  %v256 = vmax.f32 %v254, %v255
  %v257 = vrot.slane %v256, 2
  %v258 = vmax.f32 %v256, %v257
  %v259 = vrot.slane %v258, 1
  %v260 = vmax.f32 %v258, %v259
  %v261 = vsel %vm253, %v184, -inf
  %v262 = vrot.slane %v261, 4
  %v263 = vmax.f32 %v261, %v262
  %v264 = vrot.slane %v263, 2
  %v265 = vmax.f32 %v263, %v264
  %v266 = vrot.slane %v265, 1
  %v267 = vmax.f32 %v265, %v266
  %v268 = vsel %vm253, %v183, -inf
  %v269 = vrot.slane %v268, 4
  %v270 = vmax.f32 %v268, %v269
  %v271 = vrot.slane %v270, 2
  %v272 = vmax.f32 %v270, %v271
  %v273 = vrot.slane %v272, 1
  %v274 = vmax.f32 %v272, %v273
  %v275 = vsel %vm253, %v185, -inf
  %v276 = vrot.slane %v275, 4
  %v277 = vmax.f32 %v275, %v276
  %v278 = vrot.slane %v277, 2
  %v279 = vmax.f32 %v277, %v278
  %v280 = vrot.slane %v279, 1
  %v281 = vmax.f32 %v279, %v280
  %v282 = vsel %vm253, %v193, -inf
  %v283 = vrot.slane %v282, 4
  %v284 = vmax.f32 %v282, %v283
  %v285 = vrot.slane %v284, 2
  %v286 = vmax.f32 %v284, %v285
  %v287 = vrot.slane %v286, 1
  %v288 = vmax.f32 %v286, %v287
  %v289 = vsel %vm253, %v201, -inf
  %v290 = vrot.slane %v289, 4
  %v291 = vmax.f32 %v289, %v290
  %v292 = vrot.slane %v291, 2
  %v293 = vmax.f32 %v291, %v292
  %v294 = vrot.slane %v293, 1
  %v295 = vmax.f32 %v293, %v294
  %v296 = vsel %vm253, %v200, -inf
  %v297 = vrot.slane %v296, 4
  %v298 = vmax.f32 %v296, %v297
  %v299 = vrot.slane %v298, 2
  %v300 = vmax.f32 %v298, %v299
  %v301 = vrot.slane %v300, 1
  %v302 = vmax.f32 %v300, %v301
  %v303 = vsel %vm253, %v202, -inf
  %v304 = vrot.slane %v303, 4
  %v305 = vmax.f32 %v303, %v304
  %v306 = vrot.slane %v305, 2
  %v307 = vmax.f32 %v305, %v306
  %v308 = vrot.slane %v307, 1
  %v309 = vmax.f32 %v307, %v308
  %v310 = vsel %vm253, %v210, -inf
  %v311 = vrot.slane %v310, 4
  %v312 = vmax.f32 %v310, %v311
  %v313 = vrot.slane %v312, 2
  %v314 = vmax.f32 %v312, %v313
  %v315 = vrot.slane %v314, 1
  %v316 = vmax.f32 %v314, %v315
  %v317 = vsel %vm253, %v218, -inf
  %v318 = vrot.slane %v317, 4
  %v319 = vmax.f32 %v317, %v318
  %v320 = vrot.slane %v319, 2
  %v321 = vmax.f32 %v319, %v320
  %v322 = vrot.slane %v321, 1
  %v323 = vmax.f32 %v321, %v322
  %v324 = vsel %vm253, %v217, -inf
  %v325 = vrot.slane %v324, 4
  %v326 = vmax.f32 %v324, %v325
  %v327 = vrot.slane %v326, 2
  %v328 = vmax.f32 %v326, %v327
  %v329 = vrot.slane %v328, 1
  %v330 = vmax.f32 %v328, %v329
  %v331 = vsel %vm253, %v219, -inf
  %v332 = vrot.slane %v331, 4
  %v333 = vmax.f32 %v331, %v332
  %v334 = vrot.slane %v333, 2
  %v335 = vmax.f32 %v333, %v334
  %v336 = vrot.slane %v335, 1
  %v337 = vmax.f32 %v335, %v336
  %v338 = vsel %vm253, %v227, -inf
  %v339 = vrot.slane %v338, 4
  %v340 = vmax.f32 %v338, %v339
  %v341 = vrot.slane %v340, 2
  %v342 = vmax.f32 %v340, %v341
  %v343 = vrot.slane %v342, 1
  %v344 = vmax.f32 %v342, %v343
  %v345 = vsel %vm253, %v235, -inf
  %v346 = vrot.slane %v345, 4
  %v347 = vmax.f32 %v345, %v346
  %v348 = vrot.slane %v347, 2
  %v349 = vmax.f32 %v347, %v348
  %v350 = vrot.slane %v349, 1
  %v351 = vmax.f32 %v349, %v350
  %v352 = vsel %vm253, %v234, -inf
  %v353 = vrot.slane %v352, 4
  %v354 = vmax.f32 %v352, %v353
  %v355 = vrot.slane %v354, 2
  %v356 = vmax.f32 %v354, %v355
  %v357 = vrot.slane %v356, 1
  %v358 = vmax.f32 %v356, %v357
  %v359 = vsel %vm253, %v236, -inf
  %v360 = vrot.slane %v359, 4
  %v361 = vmax.f32 %v359, %v360
  %v362 = vrot.slane %v361, 2
  %v363 = vmax.f32 %v361, %v362
  %v364 = vrot.slane %v363, 1
  %v365 = vmax.f32 %v363, %v364
  %vm382 = vcmask 1042434
  %v383 = vsel %vm382, %v267, %v260
  %vm384 = vcmask 1043459
  %v385 = vsel %vm384, %v274, %v383
  %vm386 = vcmask 1044484
  %v387 = vsel %vm386, %v281, %v385
  %vm388 = vcmask 1045509
  %v389 = vsel %vm388, %v288, %v387
  %vm390 = vcmask 1046534
  %v391 = vsel %vm390, %v295, %v389
  %vm392 = vcmask 1047559
  %v393 = vsel %vm392, %v302, %v391
  %v394 = vsel %vm382, %v323, %v316
  %v395 = vsel %vm384, %v330, %v394
  %v396 = vsel %vm386, %v337, %v395
  %v397 = vsel %vm388, %v344, %v396
  %v398 = vsel %vm390, %v351, %v397
  %v399 = vsel %vm392, %v358, %v398
  %vm404 = vcmask 1040384
  %v405 = vsel %vm404, 0.0, %v393
  %v406 = vsel %vm404, 0.0, %v399
  %v407 = vsel %vm404, %v309, 0.0
  %v408 = vsel %vm404, %v365, 0.0
  %vm413 = vcmask 1046528
  %v414 = vrot.slane %v405, 1
  %v415 = vrot.slane %v407, 1
  %v416 = vsel %vm413, %v414, %v415
  %v417 = vrot.slane %v406, 1
  %v418 = vrot.slane %v408, 1
  %v419 = vsel %vm413, %v417, %v418
  %vm420 = vcmask 1045504
  %v421 = vrot.slane %v405, 2
  %v422 = vrot.slane %v407, 2
  %v423 = vsel %vm420, %v421, %v422
  %v424 = vrot.slane %v406, 2
  %v425 = vrot.slane %v408, 2
  %v426 = vsel %vm420, %v424, %v425
  %427 = vrot.lane.b32.xlu0 %v416, 64
  %v428 = vpop.permute.xlu0 %427
  %429 = vrot.lane.b32.xlu0 %v419, 64
  %v430 = vpop.permute.xlu0 %429
  %vm433 = vcmask 523264
  %v434 = vsel %vm433, %v405, %v428
  %v435 = vsel %vm433, %v406, %v430
  %v436 = vld [vmem:[%s3] sm:$0xff]
  %v437 = vld [vmem:[%s3 + $0x8] sm:$0xff]
  %v438 = vld [vmem:[%s3 + $0x10] sm:$0xff]
  %v439 = vld [vmem:[%s3 + $0x18] sm:$0xff]
  %v440 = vld [vmem:[%s3 + $0x20] sm:$0xff]
  %v441 = vld [vmem:[%s3 + $0x28] sm:$0xff]
  %v442 = vld [vmem:[%s3 + $0x30] sm:$0xff]
  %v443 = vld [vmem:[%s3 + $0x38] sm:$0xff]
  %v444 = vld [vmem:[%s3 + $0x40] sm:$0xff]
  %v445 = vld [vmem:[%s3 + $0x48] sm:$0xff]
  %v446 = vld [vmem:[%s3 + $0x50] sm:$0xff]
  %v447 = vld [vmem:[%s3 + $0x58] sm:$0xff]
  %v448 = vld [vmem:[%s3 + $0x60] sm:$0xff]
  %v449 = vld [vmem:[%s3 + $0x68] sm:$0xff]
  %v450 = vld [vmem:[%s3 + $0x70] sm:$0xff]
  %v451 = vld [vmem:[%s3 + $0x78] sm:$0xff]
  %v452 = vld [vmem:[%s3 + $0x80] sm:$0xff]
  %v453 = vld [vmem:[%s3 + $0x88] sm:$0xff]
  %v454 = vld [vmem:[%s3 + $0x90] sm:$0xff]
  %v455 = vld [vmem:[%s3 + $0x98] sm:$0xff]
  %v456 = vld [vmem:[%s3 + $0xa0] sm:$0xff]
  %v457 = vld [vmem:[%s3 + $0xa8] sm:$0xff]
  %v458 = vld [vmem:[%s3 + $0xb0] sm:$0xff]
  %v459 = vld [vmem:[%s3 + $0xb8] sm:$0xff]
  %v460 = vld [vmem:[%s4] sm:$0x1]
  %v462 = vlaneseq
  %v463 = vshrl.u32 %v462, 7
  %v464 = vsub.s32 0, %v463
  %v465 = vrot.slane %v460, %v464
  %v467 = vsel %vm433, %v423, 0
  %v469 = vsel %vm433, %v426, 0
  %471 = vmatprep.subr.mxu0 0.0
  %472 = vmatpush1.msra.mxu0 %v436
  %473 = vmatprep.subr.mxu0 0.0
  %474 = vmatpush1.msra.mxu0 %v437
  %475 = vmatprep.subr.mxu0 0.0
  %476 = vmatpush1.msra.mxu0 %v438
  %477 = vmatprep.subr.mxu0 0.0
  %478 = vmatpush1.msra.mxu0 %v439
  %479 = vmatprep.subr.mxu0 0.0
  %480 = vmatpush1.msra.mxu0 %v440
  %481 = vmatprep.subr.mxu0 0.0
  %482 = vmatpush1.msra.mxu0 %v441
  %483 = vmatprep.subr.mxu0 0.0
  %484 = vmatpush1.msra.mxu0 %v442
  %485 = vmatprep.subr.mxu0 0.0
  %486 = vmatpush1.msra.mxu0 %v443
  %487 = vmatprep.subr.mxu0 0.0
  %488 = vmatpush1.msra.mxu0 %v444
  %489 = vmatprep.subr.mxu0 0.0
  %490 = vmatpush1.msra.mxu0 %v445
  %491 = vmatprep.subr.mxu0 0.0
  %492 = vmatpush1.msra.mxu0 %v446
  %493 = vmatprep.subr.mxu0 0.0
  %494 = vmatpush1.msra.mxu0 %v447
  %495 = vmatprep.subr.mxu0 0.0
  %496 = vmatpush1.msra.mxu0 %v448
  %497 = vmatprep.subr.mxu0 0.0
  %498 = vmatpush1.msra.mxu0 %v449
  %499 = vmatprep.subr.mxu0 0.0
  %500 = vmatpush1.msra.mxu0 %v450
  %501 = vmatprep.subr.mxu0 0.0
  %502 = vmatpush1.msra.mxu0 %v451
  %503 = vmatprep.subr.mxu0 0.0
  %504 = vmatpush1.msra.mxu0 %v452
  %505 = vmatprep.subr.mxu0 0.0
  %506 = vmatpush1.msra.mxu0 %v453
  %507 = vmatprep.subr.mxu0 0.0
  %508 = vmatpush1.msra.mxu0 %v454
  %509 = vmatprep.subr.mxu0 0.0
  %510 = vmatpush1.msra.mxu0 %v455
  %511 = vmatprep.subr.mxu0 0.0
  %512 = vmatpush1.msra.mxu0 %v456
  %513 = vmatprep.subr.mxu0 0.0
  %514 = vmatpush1.msra.mxu0 %v457
  %515 = vmatprep.subr.mxu0 0.0
  %516 = vmatpush1.msra.mxu0 %v458
  %517 = vmatprep.subr.mxu0 0.0
  %518 = vmatpush1.msra.mxu0 %v459
  %519 = vmatprep.subr.mxu0 0.0
  %520 = vmatpush1.msra.mxu0 0.0
  %521 = vmatprep.subr.mxu0 0.0
  %522 = vmatpush1.msra.mxu0 0.0
  %523 = vmatprep.subr.mxu0 0.0
  %524 = vmatpush1.msra.mxu0 0.0
  %525 = vmatprep.subr.mxu0 0.0
  %526 = vmatpush1.msra.mxu0 0.0
  %527 = vmatprep.subr.mxu0 0.0
  %528 = vmatpush1.msra.mxu0 0.0
  %529 = vmatprep.subr.mxu0 0.0
  %530 = vmatpush1.msra.mxu0 0.0
  %531 = vmatprep.subr.mxu0 0.0
  %532 = vmatpush1.msra.mxu0 0.0
  %533 = vmatprep.subr.mxu0 0.0
  %534 = vmatpush1.msra.mxu0 0.0
  %535 = vmatprep.mubr.f32.mxu0 %v467
  %536 = vmatmul.mubr.f32.gmra.mrb[0].mxu0 %v434
  %v537 = vpop.f32.mrb[0].mxu0
  %v538 = vadd.f32 %v465, %v537
  %v539 = vpop.f32.mrb[0].mxu0
  %540 = vmatprep.mubr.f32.mxu0 %v469
  %541 = vmatmul.mubr.f32.gmra.mrb[0].mxu0 %v435
  %v542 = vpop.f32.mrb[0].mxu0
  %v543 = vadd.f32 %v465, %v542
  %v544 = vpop.f32.mrb[0].mxu0
  %545 = vdwg.mxu0
  %v546 = vmax.f32 %v538, 0.0
  %v547 = vmax.f32 %v543, 0.0
  %v550 = vcombine.high %v546, %v546
  %v552 = vunpack.c.l.s4 1983009808
  %v553 = vunpack.c.0.s8 %v552
  %v554 = vlaneseq
  %v555 = vshrl.u32 %v554, 7
  %v556 = vsub.s32 %v553, %v555
  %v557 = vrot.slane %v546, %v556
  %v559 = vunpack.c.l.s4 1983009808
  %v560 = vunpack.c.0.s8 %v559
  %v561 = vlaneseq
  %v562 = vshrl.u32 %v561, 7
  %v563 = vsub.s32 %v560, %v562
  %v564 = vrot.slane %v550, %v563
  %v565 = vcombine.high %v557, %v557
  %v566 = vcombine.high %v564, %v564
  %v567 = vcombine.high %v547, %v547
  %v569 = vunpack.c.l.s4 1983009808
  %v570 = vunpack.c.0.s8 %v569
  %v571 = vlaneseq
  %v572 = vshrl.u32 %v571, 7
  %v573 = vsub.s32 %v570, %v572
  %v574 = vrot.slane %v547, %v573
  %v576 = vunpack.c.l.s4 1983009808
  %v577 = vunpack.c.0.s8 %v576
  %v578 = vlaneseq
  %v579 = vshrl.u32 %v578, 7
  %v580 = vsub.s32 %v577, %v579
  %v581 = vrot.slane %v567, %v580
  %v582 = vcombine.high %v574, %v574
  %v583 = vcombine.high %v581, %v581
  %vm592 = vcmask 1041408
  %v593 = vsel %vm592, %v557, -inf
  %v594 = vrot.slane %v593, 4
  %v595 = vmax.f32 %v593, %v594
  %v596 = vrot.slane %v595, 2
  %v597 = vmax.f32 %v595, %v596
  %v598 = vrot.slane %v597, 1
  %v599 = vmax.f32 %v597, %v598
  %v600 = vsel %vm592, %v565, -inf
  %v601 = vrot.slane %v600, 4
  %v602 = vmax.f32 %v600, %v601
  %v603 = vrot.slane %v602, 2
  %v604 = vmax.f32 %v602, %v603
  %v605 = vrot.slane %v604, 1
  %v606 = vmax.f32 %v604, %v605
  %v607 = vsel %vm592, %v564, -inf
  %v608 = vrot.slane %v607, 4
  %v609 = vmax.f32 %v607, %v608
  %v610 = vrot.slane %v609, 2
  %v611 = vmax.f32 %v609, %v610
  %v612 = vrot.slane %v611, 1
  %v613 = vmax.f32 %v611, %v612
  %v614 = vsel %vm592, %v566, -inf
  %v615 = vrot.slane %v614, 4
  %v616 = vmax.f32 %v614, %v615
  %v617 = vrot.slane %v616, 2
  %v618 = vmax.f32 %v616, %v617
  %v619 = vrot.slane %v618, 1
  %v620 = vmax.f32 %v618, %v619
  %v621 = vsel %vm592, %v574, -inf
  %v622 = vrot.slane %v621, 4
  %v623 = vmax.f32 %v621, %v622
  %v624 = vrot.slane %v623, 2
  %v625 = vmax.f32 %v623, %v624
  %v626 = vrot.slane %v625, 1
  %v627 = vmax.f32 %v625, %v626
  %v628 = vsel %vm592, %v582, -inf
  %v629 = vrot.slane %v628, 4
  %v630 = vmax.f32 %v628, %v629
  %v631 = vrot.slane %v630, 2
  %v632 = vmax.f32 %v630, %v631
  %v633 = vrot.slane %v632, 1
  %v634 = vmax.f32 %v632, %v633
  %v635 = vsel %vm592, %v581, -inf
  %v636 = vrot.slane %v635, 4
  %v637 = vmax.f32 %v635, %v636
  %v638 = vrot.slane %v637, 2
  %v639 = vmax.f32 %v637, %v638
  %v640 = vrot.slane %v639, 1
  %v641 = vmax.f32 %v639, %v640
  %v642 = vsel %vm592, %v583, -inf
  %v643 = vrot.slane %v642, 4
  %v644 = vmax.f32 %v642, %v643
  %v645 = vrot.slane %v644, 2
  %v646 = vmax.f32 %v644, %v645
  %v647 = vrot.slane %v646, 1
  %v648 = vmax.f32 %v646, %v647
  %v649 = vld [vmem:[%s5] sm:$0xff]
  %v650 = vld [vmem:[%s5 + $0x8] sm:$0xff]
  %v651 = vld [vmem:[%s5 + $0x10] sm:$0xff]
  %v652 = vld [vmem:[%s5 + $0x18] sm:$0xff]
  %v653 = vld [vmem:[%s5 + $0x20] sm:$0xff]
  %v654 = vld [vmem:[%s5 + $0x28] sm:$0xff]
  %v655 = vld [vmem:[%s5 + $0x30] sm:$0xff]
  %v656 = vld [vmem:[%s5 + $0x38] sm:$0xff]
  %v657 = vld [vmem:[%s5 + $0x40] sm:$0xff]
  %v658 = vld [vmem:[%s5 + $0x48] sm:$0xff]
  %v659 = vld [vmem:[%s5 + $0x50] sm:$0xff]
  %v660 = vld [vmem:[%s5 + $0x58] sm:$0xff]
  %v661 = vld [vmem:[%s5 + $0x60] sm:$0xff]
  %v662 = vld [vmem:[%s5 + $0x68] sm:$0xff]
  %v663 = vld [vmem:[%s5 + $0x70] sm:$0xff]
  %v664 = vld [vmem:[%s5 + $0x78] sm:$0xff]
  %v665 = vld [vmem:[%s7] sm:$0x1]
  %v667 = vlaneseq
  %v668 = vshrl.u32 %v667, 7
  %v669 = vsub.s32 0, %v668
  %v670 = vrot.slane %v665, %v669
  %vm680 = vcmask 1041409
  %v681 = vsel %vm680, %v606, %v599
  %v682 = vsel %vm382, %v613, %v681
  %v683 = vsel %vm384, %v620, %v682
  %v684 = vsel %vm386, %v627, %v683
  %v685 = vsel %vm388, %v634, %v684
  %v686 = vsel %vm390, %v641, %v685
  %v687 = vsel %vm392, %v648, %v686
  %689 = vmatprep.subr.mxu0 0.0
  %690 = vmatpush1.msra.mxu0 %v649
  %691 = vmatprep.subr.mxu0 0.0
  %692 = vmatpush1.msra.mxu0 %v650
  %693 = vmatprep.subr.mxu0 0.0
  %694 = vmatpush1.msra.mxu0 %v651
  %695 = vmatprep.subr.mxu0 0.0
  %696 = vmatpush1.msra.mxu0 %v652
  %697 = vmatprep.subr.mxu0 0.0
  %698 = vmatpush1.msra.mxu0 %v653
  %699 = vmatprep.subr.mxu0 0.0
  %700 = vmatpush1.msra.mxu0 %v654
  %701 = vmatprep.subr.mxu0 0.0
  %702 = vmatpush1.msra.mxu0 %v655
  %703 = vmatprep.subr.mxu0 0.0
  %704 = vmatpush1.msra.mxu0 %v656
  %705 = vmatprep.subr.mxu0 0.0
  %706 = vmatpush1.msra.mxu0 %v657
  %707 = vmatprep.subr.mxu0 0.0
  %708 = vmatpush1.msra.mxu0 %v658
  %709 = vmatprep.subr.mxu0 0.0
  %710 = vmatpush1.msra.mxu0 %v659
  %711 = vmatprep.subr.mxu0 0.0
  %712 = vmatpush1.msra.mxu0 %v660
  %713 = vmatprep.subr.mxu0 0.0
  %714 = vmatpush1.msra.mxu0 %v661
  %715 = vmatprep.subr.mxu0 0.0
  %716 = vmatpush1.msra.mxu0 %v662
  %717 = vmatprep.subr.mxu0 0.0
  %718 = vmatpush1.msra.mxu0 %v663
  %719 = vmatprep.subr.mxu0 0.0
  %720 = vmatpush1.msra.mxu0 %v664
  %721 = vmatprep.subr.mxu0 0.0
  %722 = vmatpush1.msra.mxu0 0.0
  %723 = vmatprep.subr.mxu0 0.0
  %724 = vmatpush1.msra.mxu0 0.0
  %725 = vmatprep.subr.mxu0 0.0
  %726 = vmatpush1.msra.mxu0 0.0
  %727 = vmatprep.subr.mxu0 0.0
  %728 = vmatpush1.msra.mxu0 0.0
  %729 = vmatprep.subr.mxu0 0.0
  %730 = vmatpush1.msra.mxu0 0.0
  %731 = vmatprep.subr.mxu0 0.0
  %732 = vmatpush1.msra.mxu0 0.0
  %733 = vmatprep.subr.mxu0 0.0
  %734 = vmatpush1.msra.mxu0 0.0
  %735 = vmatprep.subr.mxu0 0.0
  %736 = vmatpush1.msra.mxu0 0.0
  %737 = vmatprep.subr.mxu0 0.0
  %738 = vmatpush1.msra.mxu0 0.0
  %739 = vmatprep.subr.mxu0 0.0
  %740 = vmatpush1.msra.mxu0 0.0
  %741 = vmatprep.subr.mxu0 0.0
  %742 = vmatpush1.msra.mxu0 0.0
  %743 = vmatprep.subr.mxu0 0.0
  %744 = vmatpush1.msra.mxu0 0.0
  %745 = vmatprep.subr.mxu0 0.0
  %746 = vmatpush1.msra.mxu0 0.0
  %747 = vmatprep.subr.mxu0 0.0
  %748 = vmatpush1.msra.mxu0 0.0
  %749 = vmatprep.subr.mxu0 0.0
  %750 = vmatpush1.msra.mxu0 0.0
  %751 = vmatprep.subr.mxu0 0.0
  %752 = vmatpush1.msra.mxu0 0.0
  %753 = vmatprep.mubr.f32.mxu0 0.0
  %754 = vmatmul.mubr.f32.gmra.mrb[0].mxu0 %v687
  %v755 = vpop.f32.mrb[0].mxu0
  %v756 = vadd.f32 %v670, %v755
  %v757 = vpop.f32.mrb[0].mxu0
  %758 = vdwg.mxu0
  %v760 = vcombine.high %v756, %v756
  %v762 = vld [vmem:[%s6] sm:$0xff]
  %v763 = vld [vmem:[%s6 + $0x8] sm:$0xff]
  %v764 = vld [vmem:[%s6 + $0x10] sm:$0xff]
  %v765 = vld [vmem:[%s6 + $0x18] sm:$0xff]
  %v766 = vld [vmem:[%s8] sm:$0xff]
  %v767 = vld [vmem:[%s8 + $0x8] sm:$0xff]
  %v768 = vld [vmem:[%s8 + $0x10] sm:$0xff]
  %v769 = vld [vmem:[%s8 + $0x18] sm:$0xff]
  %v770 = vld [vmem:[%s9] sm:$0xff]
  %v771 = vld [vmem:[%s9 + $0x8] sm:$0xff]
  %v772 = vld [vmem:[%s9 + $0x10] sm:$0xff]
  %v773 = vld [vmem:[%s9 + $0x18] sm:$0xff]
  %v774 = vld [vmem:[%s10] sm:$0x1]
  %vm775 = vcmask 261120
  %v777 = vsel %vm775, 0.0, 0
  %779 = vmatprep.subr.mxu0 0.0
  %780 = vmatpush1.msra.mxu0 %v762
  %781 = vmatprep.subr.mxu0 0.0
  %782 = vmatpush1.msra.mxu0 %v763
  %783 = vmatprep.subr.mxu0 0.0
  %784 = vmatpush1.msra.mxu0 %v764
  %785 = vmatprep.subr.mxu0 0.0
  %786 = vmatpush1.msra.mxu0 %v765
  %787 = vmatprep.subr.mxu0 0.0
  %788 = vmatpush1.msra.mxu0 0.0
  %789 = vmatprep.subr.mxu0 0.0
  %790 = vmatpush1.msra.mxu0 0.0
  %791 = vmatprep.subr.mxu0 0.0
  %792 = vmatpush1.msra.mxu0 0.0
  %793 = vmatprep.subr.mxu0 0.0
  %794 = vmatpush1.msra.mxu0 0.0
  %795 = vmatprep.subr.mxu0 0.0
  %796 = vmatpush1.msra.mxu0 0.0
  %797 = vmatprep.subr.mxu0 0.0
  %798 = vmatpush1.msra.mxu0 0.0
  %799 = vmatprep.subr.mxu0 0.0
  %800 = vmatpush1.msra.mxu0 0.0
  %801 = vmatprep.subr.mxu0 0.0
  %802 = vmatpush1.msra.mxu0 0.0
  %803 = vmatprep.subr.mxu0 0.0
  %804 = vmatpush1.msra.mxu0 0.0
  %805 = vmatprep.subr.mxu0 0.0
  %806 = vmatpush1.msra.mxu0 0.0
  %807 = vmatprep.subr.mxu0 0.0
  %808 = vmatpush1.msra.mxu0 0.0
  %809 = vmatprep.subr.mxu0 0.0
  %810 = vmatpush1.msra.mxu0 0.0
  %811 = vmatprep.subr.mxu0 0.0
  %812 = vmatpush1.msra.mxu0 0.0
  %813 = vmatprep.subr.mxu0 0.0
  %814 = vmatpush1.msra.mxu0 0.0
  %815 = vmatprep.subr.mxu0 0.0
  %816 = vmatpush1.msra.mxu0 0.0
  %817 = vmatprep.subr.mxu0 0.0
  %818 = vmatpush1.msra.mxu0 0.0
  %819 = vmatprep.subr.mxu0 0.0
  %820 = vmatpush1.msra.mxu0 0.0
  %821 = vmatprep.subr.mxu0 0.0
  %822 = vmatpush1.msra.mxu0 0.0
  %823 = vmatprep.subr.mxu0 0.0
  %824 = vmatpush1.msra.mxu0 0.0
  %825 = vmatprep.subr.mxu0 0.0
  %826 = vmatpush1.msra.mxu0 0.0
  %827 = vmatprep.subr.mxu0 0.0
  %828 = vmatpush1.msra.mxu0 0.0
  %829 = vmatprep.subr.mxu0 0.0
  %830 = vmatpush1.msra.mxu0 0.0
  %831 = vmatprep.subr.mxu0 0.0
  %832 = vmatpush1.msra.mxu0 0.0
  %833 = vmatprep.subr.mxu0 0.0
  %834 = vmatpush1.msra.mxu0 0.0
  %835 = vmatprep.subr.mxu0 0.0
  %836 = vmatpush1.msra.mxu0 0.0
  %837 = vmatprep.subr.mxu0 0.0
  %838 = vmatpush1.msra.mxu0 0.0
  %839 = vmatprep.subr.mxu0 0.0
  %840 = vmatpush1.msra.mxu0 0.0
  %841 = vmatprep.subr.mxu0 0.0
  %842 = vmatpush1.msra.mxu0 0.0
  %843 = vmatprep.mubr.f32.mxu0 0.0
  %844 = vmatmul.mubr.f32.gmra.mrb[0].mxu0 %v777
  %v845 = vpop.f32.mrb[0].mxu0
  %v846 = vadd.f32 0.0, %v845
  %v847 = vpop.f32.mrb[0].mxu0
  %848 = vdwg.mxu0
  %v850 = vrot.slane %v846, 1
  %v853 = vadd.f32 %v756, %v846
  %v854 = vadd.f32 %v760, %v850
  %v855 = vxor.u32 %v853, 2147483648
  %v856 = vxor.u32 %v854, 2147483648
  %v857 = vmul.f32 %v855, 1.442695
  %v858 = vpow.pop %v857
  %v859 = vmul.f32 %v856, 1.442695
  %v860 = vpow.pop %v859
  %v861 = vadd.f32 %v858, 1.0
  %v862 = vadd.f32 %v860, 1.0
  %v863 = vrcp.pop %v861
  %v864 = vmul.f32 1.0, %v863
  %v865 = vrcp.pop %v862
  %v866 = vmul.f32 1.0, %v865
  %v867 = vtanh.pop %v853
  %v868 = vtanh.pop %v854
  %v869 = vmul.f32 %v864, 0.0
  %v870 = vmul.f32 %v866, 0.0
  %873 = vrot.lane.b32.xlu0 %v867, 64
  %v874 = vpop.permute.xlu0 %873
  %875 = vrot.lane.b32.xlu0 %v868, 64
  %v876 = vpop.permute.xlu0 %875
  %v879 = vmul.f32 %v864, %v874
  %v880 = vmul.f32 %v866, %v876
  %883 = vrot.lane.b32.xlu0 %v879, 32
  %v884 = vpop.permute.xlu0 %883
  %885 = vrot.lane.b32.xlu0 %v880, 32
  %v886 = vpop.permute.xlu0 %885
  %v889 = vadd.f32 %v869, %v884
  %v890 = vadd.f32 %v870, %v886
  %v891 = vtanh.pop %v889
  %v892 = vtanh.pop %v890
  %895 = vrot.lane.b32.xlu0 %v891, 64
  %v896 = vpop.permute.xlu0 %895
  %897 = vrot.lane.b32.xlu0 %v892, 64
  %v898 = vpop.permute.xlu0 %897
  %v901 = vmul.f32 %v864, %v896
  %v902 = vmul.f32 %v866, %v898
  %903 = vmatprep.subr.mxu0 0.0
  %904 = vmatpush1.msra.mxu0 %v770
  %905 = vmatprep.subr.mxu0 0.0
  %906 = vmatpush1.msra.mxu0 %v771
  %907 = vmatprep.subr.mxu0 0.0
  %908 = vmatpush1.msra.mxu0 %v772
  %909 = vmatprep.subr.mxu0 0.0
  %910 = vmatpush1.msra.mxu0 %v773
  %911 = vmatprep.subr.mxu0 0.0
  %912 = vmatpush1.msra.mxu0 0.0
  %913 = vmatprep.subr.mxu0 0.0
  %914 = vmatpush1.msra.mxu0 0.0
  %915 = vmatprep.subr.mxu0 0.0
  %916 = vmatpush1.msra.mxu0 0.0
  %917 = vmatprep.subr.mxu0 0.0
  %918 = vmatpush1.msra.mxu0 0.0
  %919 = vmatprep.subr.mxu0 0.0
  %920 = vmatpush1.msra.mxu0 0.0
  %921 = vmatprep.subr.mxu0 0.0
  %922 = vmatpush1.msra.mxu0 0.0
  %923 = vmatprep.subr.mxu0 0.0
  %924 = vmatpush1.msra.mxu0 0.0
  %925 = vmatprep.subr.mxu0 0.0
  %926 = vmatpush1.msra.mxu0 0.0
  %927 = vmatprep.subr.mxu0 0.0
  %928 = vmatpush1.msra.mxu0 0.0
  %929 = vmatprep.subr.mxu0 0.0
  %930 = vmatpush1.msra.mxu0 0.0
  %931 = vmatprep.subr.mxu0 0.0
  %932 = vmatpush1.msra.mxu0 0.0
  %933 = vmatprep.subr.mxu0 0.0
  %934 = vmatpush1.msra.mxu0 0.0
  %935 = vmatprep.subr.mxu0 0.0
  %936 = vmatpush1.msra.mxu0 0.0
  %937 = vmatprep.subr.mxu0 0.0
  %938 = vmatpush1.msra.mxu0 0.0
  %939 = vmatprep.subr.mxu0 0.0
  %940 = vmatpush1.msra.mxu0 0.0
  %941 = vmatprep.subr.mxu0 0.0
  %942 = vmatpush1.msra.mxu0 0.0
  %943 = vmatprep.subr.mxu0 0.0
  %944 = vmatpush1.msra.mxu0 0.0
  %945 = vmatprep.subr.mxu0 0.0
  %946 = vmatpush1.msra.mxu0 0.0
  %947 = vmatprep.subr.mxu0 0.0
  %948 = vmatpush1.msra.mxu0 0.0
  %949 = vmatprep.subr.mxu0 0.0
  %950 = vmatpush1.msra.mxu0 0.0
  %951 = vmatprep.subr.mxu0 0.0
  %952 = vmatpush1.msra.mxu0 0.0
  %953 = vmatprep.subr.mxu0 0.0
  %954 = vmatpush1.msra.mxu0 0.0
  %955 = vmatprep.subr.mxu0 0.0
  %956 = vmatpush1.msra.mxu0 0.0
  %957 = vmatprep.subr.mxu0 0.0
  %958 = vmatpush1.msra.mxu0 0.0
  %959 = vmatprep.subr.mxu0 0.0
  %960 = vmatpush1.msra.mxu0 0.0
  %961 = vmatprep.subr.mxu0 0.0
  %962 = vmatpush1.msra.mxu0 0.0
  %963 = vmatprep.subr.mxu0 0.0
  %964 = vmatpush1.msra.mxu0 0.0
  %965 = vmatprep.subr.mxu0 0.0
  %966 = vmatpush1.msra.mxu0 0.0
  %967 = vmatprep.mubr.f32.mxu0 0.0
  %968 = vmatmul.mubr.f32.gmra.mrb[0].mxu0 %v777
  %v969 = vpop.f32.mrb[0].mxu0
  %v970 = vadd.f32 0.0, %v969
  %v971 = vpop.f32.mrb[0].mxu0
  %972 = vdwg.mxu0
  %v975 = vlaneseq
  %v976 = vshrl.u32 %v975, 7
  %v977 = vsub.s32 0, %v976
  %v978 = vrot.slane %v901, %v977
  %v979 = vlaneseq
  %v980 = vshrl.u32 %v979, 7
  %v981 = vsub.s32 0, %v980
  %v982 = vrot.slane %v902, %v981
  %v983 = vsel %vm680, %v982, %v978
  %984 = vrot.lane.b32.xlu0 %v983, 32
  %v985 = vpop.permute.xlu0 %984
  %v986 = vsel %vm775, %v985, 0
  %988 = vmatprep.subr.mxu0 0.0
  %989 = vmatpush1.msra.mxu0 %v766
  %990 = vmatprep.subr.mxu0 0.0
  %991 = vmatpush1.msra.mxu0 %v767
  %992 = vmatprep.subr.mxu0 0.0
  %993 = vmatpush1.msra.mxu0 %v768
  %994 = vmatprep.subr.mxu0 0.0
  %995 = vmatpush1.msra.mxu0 %v769
  %996 = vmatprep.subr.mxu0 0.0
  %997 = vmatpush1.msra.mxu0 0.0
  %998 = vmatprep.subr.mxu0 0.0
  %999 = vmatpush1.msra.mxu0 0.0
  %1000 = vmatprep.subr.mxu0 0.0
  %1001 = vmatpush1.msra.mxu0 0.0
  %1002 = vmatprep.subr.mxu0 0.0
  %1003 = vmatpush1.msra.mxu0 0.0
  %1004 = vmatprep.subr.mxu0 0.0
  %1005 = vmatpush1.msra.mxu0 0.0
  %1006 = vmatprep.subr.mxu0 0.0
  %1007 = vmatpush1.msra.mxu0 0.0
  %1008 = vmatprep.subr.mxu0 0.0
  %1009 = vmatpush1.msra.mxu0 0.0
  %1010 = vmatprep.subr.mxu0 0.0
  %1011 = vmatpush1.msra.mxu0 0.0
  %1012 = vmatprep.subr.mxu0 0.0
  %1013 = vmatpush1.msra.mxu0 0.0
  %1014 = vmatprep.subr.mxu0 0.0
  %1015 = vmatpush1.msra.mxu0 0.0
  %1016 = vmatprep.subr.mxu0 0.0
  %1017 = vmatpush1.msra.mxu0 0.0
  %1018 = vmatprep.subr.mxu0 0.0
  %1019 = vmatpush1.msra.mxu0 0.0
  %1020 = vmatprep.subr.mxu0 0.0
  %1021 = vmatpush1.msra.mxu0 0.0
  %1022 = vmatprep.subr.mxu0 0.0
  %1023 = vmatpush1.msra.mxu0 0.0
  %1024 = vmatprep.subr.mxu0 0.0
  %1025 = vmatpush1.msra.mxu0 0.0
  %1026 = vmatprep.subr.mxu0 0.0
  %1027 = vmatpush1.msra.mxu0 0.0
  %1028 = vmatprep.subr.mxu0 0.0
  %1029 = vmatpush1.msra.mxu0 0.0
  %1030 = vmatprep.subr.mxu0 0.0
  %1031 = vmatpush1.msra.mxu0 0.0
  %1032 = vmatprep.subr.mxu0 0.0
  %1033 = vmatpush1.msra.mxu0 0.0
  %1034 = vmatprep.subr.mxu0 0.0
  %1035 = vmatpush1.msra.mxu0 0.0
  %1036 = vmatprep.subr.mxu0 0.0
  %1037 = vmatpush1.msra.mxu0 0.0
  %1038 = vmatprep.subr.mxu0 0.0
  %1039 = vmatpush1.msra.mxu0 0.0
  %1040 = vmatprep.subr.mxu0 0.0
  %1041 = vmatpush1.msra.mxu0 0.0
  %1042 = vmatprep.subr.mxu0 0.0
  %1043 = vmatpush1.msra.mxu0 0.0
  %1044 = vmatprep.subr.mxu0 0.0
  %1045 = vmatpush1.msra.mxu0 0.0
  %1046 = vmatprep.subr.mxu0 0.0
  %1047 = vmatpush1.msra.mxu0 0.0
  %1048 = vmatprep.subr.mxu0 0.0
  %1049 = vmatpush1.msra.mxu0 0.0
  %1050 = vmatprep.subr.mxu0 0.0
  %1051 = vmatpush1.msra.mxu0 0.0
  %1052 = vmatprep.mubr.f32.mxu0 0.0
  %1053 = vmatmul.mubr.f32.gmra.mrb[0].mxu0 %v986
  %v1054 = vpop.f32.mrb[0].mxu0
  %v1055 = vadd.f32 %v970, %v1054
  %v1056 = vpop.f32.mrb[0].mxu0
  %1057 = vdwg.mxu0
  %v1059 = vlaneseq
  %v1060 = vshrl.u32 %v1059, 7
  %v1061 = vsub.s32 0, %v1060
  %v1062 = vrot.slane %v774, %v1061
  %v1064 = vadd.f32 %v1055, %v1062
  %v1065 = vxor.u32 %v1064, 2147483648
  %v1066 = vmul.f32 %v1065, 1.442695
  %v1067 = vpow.pop %v1066
  %v1068 = vadd.f32 %v1067, 1.0
  %v1069 = vrcp.pop %v1068
  %v1070 = vmul.f32 1.0, %v1069
  %v1071 = vtanh.pop %v1064
  %v1072 = vmul.f32 %v1070, 0.0
  %1074 = vrot.lane.b32.xlu0 %v1071, 64
  %v1075 = vpop.permute.xlu0 %1074
  %v1077 = vmul.f32 %v1070, %v1075
  %1079 = vrot.lane.b32.xlu0 %v1077, 32
  %v1080 = vpop.permute.xlu0 %1079
  %v1082 = vadd.f32 %v1072, %v1080
  %v1083 = vtanh.pop %v1082
  %1085 = vrot.lane.b32.xlu0 %v1083, 64
  %v1086 = vpop.permute.xlu0 %1085
  %v1088 = vmul.f32 %v1070, %v1086
  %1089 = vmatprep.subr.mxu0 0.0
  %1090 = vmatpush1.msra.mxu0 %v762
  %1091 = vmatprep.subr.mxu0 0.0
  %1092 = vmatpush1.msra.mxu0 %v763
  %1093 = vmatprep.subr.mxu0 0.0
  %1094 = vmatpush1.msra.mxu0 %v764
  %1095 = vmatprep.subr.mxu0 0.0
  %1096 = vmatpush1.msra.mxu0 %v765
  %1097 = vmatprep.subr.mxu0 0.0
  %1098 = vmatpush1.msra.mxu0 0.0
  %1099 = vmatprep.subr.mxu0 0.0
  %1100 = vmatpush1.msra.mxu0 0.0
  %1101 = vmatprep.subr.mxu0 0.0
  %1102 = vmatpush1.msra.mxu0 0.0
  %1103 = vmatprep.subr.mxu0 0.0
  %1104 = vmatpush1.msra.mxu0 0.0
  %1105 = vmatprep.subr.mxu0 0.0
  %1106 = vmatpush1.msra.mxu0 0.0
  %1107 = vmatprep.subr.mxu0 0.0
  %1108 = vmatpush1.msra.mxu0 0.0
  %1109 = vmatprep.subr.mxu0 0.0
  %1110 = vmatpush1.msra.mxu0 0.0
  %1111 = vmatprep.subr.mxu0 0.0
  %1112 = vmatpush1.msra.mxu0 0.0
  %1113 = vmatprep.subr.mxu0 0.0
  %1114 = vmatpush1.msra.mxu0 0.0
  %1115 = vmatprep.subr.mxu0 0.0
  %1116 = vmatpush1.msra.mxu0 0.0
  %1117 = vmatprep.subr.mxu0 0.0
  %1118 = vmatpush1.msra.mxu0 0.0
  %1119 = vmatprep.subr.mxu0 0.0
  %1120 = vmatpush1.msra.mxu0 0.0
  %1121 = vmatprep.subr.mxu0 0.0
  %1122 = vmatpush1.msra.mxu0 0.0
  %1123 = vmatprep.subr.mxu0 0.0
  %1124 = vmatpush1.msra.mxu0 0.0
  %1125 = vmatprep.subr.mxu0 0.0
  %1126 = vmatpush1.msra.mxu0 0.0
  %1127 = vmatprep.subr.mxu0 0.0
  %1128 = vmatpush1.msra.mxu0 0.0
  %1129 = vmatprep.subr.mxu0 0.0
  %1130 = vmatpush1.msra.mxu0 0.0
  %1131 = vmatprep.subr.mxu0 0.0
  %1132 = vmatpush1.msra.mxu0 0.0
  %1133 = vmatprep.subr.mxu0 0.0
  %1134 = vmatpush1.msra.mxu0 0.0
  %1135 = vmatprep.subr.mxu0 0.0
  %1136 = vmatpush1.msra.mxu0 0.0
  %1137 = vmatprep.subr.mxu0 0.0
  %1138 = vmatpush1.msra.mxu0 0.0
  %1139 = vmatprep.subr.mxu0 0.0
  %1140 = vmatpush1.msra.mxu0 0.0
  %1141 = vmatprep.subr.mxu0 0.0
  %1142 = vmatpush1.msra.mxu0 0.0
  %1143 = vmatprep.subr.mxu0 0.0
  %1144 = vmatpush1.msra.mxu0 0.0
  %1145 = vmatprep.subr.mxu0 0.0
  %1146 = vmatpush1.msra.mxu0 0.0
  %1147 = vmatprep.subr.mxu0 0.0
  %1148 = vmatpush1.msra.mxu0 0.0
  %1149 = vmatprep.subr.mxu0 0.0
  %1150 = vmatpush1.msra.mxu0 0.0
  %1151 = vmatprep.subr.mxu0 0.0
  %1152 = vmatpush1.msra.mxu0 0.0
  %1153 = vmatprep.mubr.f32.mxu0 0.0
  %1154 = vmatmul.mubr.f32.gmra.mrb[0].mxu0 %v986
  %v1155 = vpop.f32.mrb[0].mxu0
  %v1156 = vadd.f32 0.0, %v1155
  %v1157 = vpop.f32.mrb[0].mxu0
  %1158 = vdwg.mxu0
  %v1160 = vrot.slane %v1156, 7
  %v1163 = vadd.f32 %v756, %v1160
  %v1164 = vadd.f32 %v760, %v1156
  %v1165 = vxor.u32 %v1163, 2147483648
  %v1166 = vxor.u32 %v1164, 2147483648
  %v1167 = vmul.f32 %v1165, 1.442695
  %v1168 = vpow.pop %v1167
  %v1169 = vmul.f32 %v1166, 1.442695
  %v1170 = vpow.pop %v1169
  %v1171 = vadd.f32 %v1168, 1.0
  %v1172 = vadd.f32 %v1170, 1.0
  %v1173 = vrcp.pop %v1171
  %v1174 = vmul.f32 1.0, %v1173
  %v1175 = vrcp.pop %v1172
  %v1176 = vmul.f32 1.0, %v1175
  %v1177 = vtanh.pop %v1163
  %v1178 = vtanh.pop %v1164
  %v1181 = vrot.slane %v889, 7
  %v1182 = vrot.slane %v890, 7
  %v1185 = vmul.f32 %v1174, %v1181
  %v1186 = vmul.f32 %v1176, %v1182
  %1189 = vrot.lane.b32.xlu0 %v1177, 64
  %v1190 = vpop.permute.xlu0 %1189
  %1191 = vrot.lane.b32.xlu0 %v1178, 64
  %v1192 = vpop.permute.xlu0 %1191
  %v1195 = vmul.f32 %v1174, %v1190
  %v1196 = vmul.f32 %v1176, %v1192
  %1199 = vrot.lane.b32.xlu0 %v1195, 32
  %v1200 = vpop.permute.xlu0 %1199
  %1201 = vrot.lane.b32.xlu0 %v1196, 32
  %v1202 = vpop.permute.xlu0 %1201
  %v1205 = vadd.f32 %v1185, %v1200
  %v1206 = vadd.f32 %v1186, %v1202
  %v1207 = vtanh.pop %v1205
  %v1208 = vtanh.pop %v1206
  %1211 = vrot.lane.b32.xlu0 %v1207, 64
  %v1212 = vpop.permute.xlu0 %1211
  %1213 = vrot.lane.b32.xlu0 %v1208, 64
  %v1214 = vpop.permute.xlu0 %1213
  %v1217 = vmul.f32 %v1174, %v1212
  %v1218 = vmul.f32 %v1176, %v1214
  %1220 = vrot.lane.b32.xlu0 %v1088, 32
  %v1221 = vpop.permute.xlu0 %1220
  %v1222 = vsel %vm775, %v1221, 0
  %1224 = vmatprep.subr.mxu0 0.0
  %1225 = vmatpush1.msra.mxu0 %v770
  %1226 = vmatprep.subr.mxu0 0.0
  %1227 = vmatpush1.msra.mxu0 %v771
  %1228 = vmatprep.subr.mxu0 0.0
  %1229 = vmatpush1.msra.mxu0 %v772
  %1230 = vmatprep.subr.mxu0 0.0
  %1231 = vmatpush1.msra.mxu0 %v773
  %1232 = vmatprep.subr.mxu0 0.0
  %1233 = vmatpush1.msra.mxu0 0.0
  %1234 = vmatprep.subr.mxu0 0.0
  %1235 = vmatpush1.msra.mxu0 0.0
  %1236 = vmatprep.subr.mxu0 0.0
  %1237 = vmatpush1.msra.mxu0 0.0
  %1238 = vmatprep.subr.mxu0 0.0
  %1239 = vmatpush1.msra.mxu0 0.0
  %1240 = vmatprep.subr.mxu0 0.0
  %1241 = vmatpush1.msra.mxu0 0.0
  %1242 = vmatprep.subr.mxu0 0.0
  %1243 = vmatpush1.msra.mxu0 0.0
  %1244 = vmatprep.subr.mxu0 0.0
  %1245 = vmatpush1.msra.mxu0 0.0
  %1246 = vmatprep.subr.mxu0 0.0
  %1247 = vmatpush1.msra.mxu0 0.0
  %1248 = vmatprep.subr.mxu0 0.0
  %1249 = vmatpush1.msra.mxu0 0.0
  %1250 = vmatprep.subr.mxu0 0.0
  %1251 = vmatpush1.msra.mxu0 0.0
  %1252 = vmatprep.subr.mxu0 0.0
  %1253 = vmatpush1.msra.mxu0 0.0
  %1254 = vmatprep.subr.mxu0 0.0
  %1255 = vmatpush1.msra.mxu0 0.0
  %1256 = vmatprep.subr.mxu0 0.0
  %1257 = vmatpush1.msra.mxu0 0.0
  %1258 = vmatprep.subr.mxu0 0.0
  %1259 = vmatpush1.msra.mxu0 0.0
  %1260 = vmatprep.subr.mxu0 0.0
  %1261 = vmatpush1.msra.mxu0 0.0
  %1262 = vmatprep.subr.mxu0 0.0
  %1263 = vmatpush1.msra.mxu0 0.0
  %1264 = vmatprep.subr.mxu0 0.0
  %1265 = vmatpush1.msra.mxu0 0.0
  %1266 = vmatprep.subr.mxu0 0.0
  %1267 = vmatpush1.msra.mxu0 0.0
  %1268 = vmatprep.subr.mxu0 0.0
  %1269 = vmatpush1.msra.mxu0 0.0
  %1270 = vmatprep.subr.mxu0 0.0
  %1271 = vmatpush1.msra.mxu0 0.0
  %1272 = vmatprep.subr.mxu0 0.0
  %1273 = vmatpush1.msra.mxu0 0.0
  %1274 = vmatprep.subr.mxu0 0.0
  %1275 = vmatpush1.msra.mxu0 0.0
  %1276 = vmatprep.subr.mxu0 0.0
  %1277 = vmatpush1.msra.mxu0 0.0
  %1278 = vmatprep.subr.mxu0 0.0
  %1279 = vmatpush1.msra.mxu0 0.0
  %1280 = vmatprep.subr.mxu0 0.0
  %1281 = vmatpush1.msra.mxu0 0.0
  %1282 = vmatprep.subr.mxu0 0.0
  %1283 = vmatpush1.msra.mxu0 0.0
  %1284 = vmatprep.subr.mxu0 0.0
  %1285 = vmatpush1.msra.mxu0 0.0
  %1286 = vmatprep.subr.mxu0 0.0
  %1287 = vmatpush1.msra.mxu0 0.0
  %1288 = vmatprep.mubr.f32.mxu0 0.0
  %1289 = vmatmul.mubr.f32.gmra.mrb[0].mxu0 %v1222
  %v1290 = vpop.f32.mrb[0].mxu0
  %v1291 = vadd.f32 0.0, %v1290
  %v1292 = vpop.f32.mrb[0].mxu0
  %1293 = vdwg.mxu0
  %v1296 = vlaneseq
  %v1297 = vshrl.u32 %v1296, 7
  %v1298 = vsub.s32 1, %v1297
  %v1299 = vrot.slane %v1217, %v1298
  %v1300 = vlaneseq
  %v1301 = vshrl.u32 %v1300, 7
  %v1302 = vsub.s32 1, %v1301
  %v1303 = vrot.slane %v1218, %v1302
  %v1304 = vsel %vm680, %v1303, %v1299
  %1305 = vrot.lane.b32.xlu0 %v1304, 32
  %v1306 = vpop.permute.xlu0 %1305
  %v1307 = vsel %vm775, %v1306, 0
  %1309 = vmatprep.subr.mxu0 0.0
  %1310 = vmatpush1.msra.mxu0 %v766
  %1311 = vmatprep.subr.mxu0 0.0
  %1312 = vmatpush1.msra.mxu0 %v767
  %1313 = vmatprep.subr.mxu0 0.0
  %1314 = vmatpush1.msra.mxu0 %v768
  %1315 = vmatprep.subr.mxu0 0.0
  %1316 = vmatpush1.msra.mxu0 %v769
  %1317 = vmatprep.subr.mxu0 0.0
  %1318 = vmatpush1.msra.mxu0 0.0
  %1319 = vmatprep.subr.mxu0 0.0
  %1320 = vmatpush1.msra.mxu0 0.0
  %1321 = vmatprep.subr.mxu0 0.0
  %1322 = vmatpush1.msra.mxu0 0.0
  %1323 = vmatprep.subr.mxu0 0.0
  %1324 = vmatpush1.msra.mxu0 0.0
  %1325 = vmatprep.subr.mxu0 0.0
  %1326 = vmatpush1.msra.mxu0 0.0
  %1327 = vmatprep.subr.mxu0 0.0
  %1328 = vmatpush1.msra.mxu0 0.0
  %1329 = vmatprep.subr.mxu0 0.0
  %1330 = vmatpush1.msra.mxu0 0.0
  %1331 = vmatprep.subr.mxu0 0.0
  %1332 = vmatpush1.msra.mxu0 0.0
  %1333 = vmatprep.subr.mxu0 0.0
  %1334 = vmatpush1.msra.mxu0 0.0
  %1335 = vmatprep.subr.mxu0 0.0
  %1336 = vmatpush1.msra.mxu0 0.0
  %1337 = vmatprep.subr.mxu0 0.0
  %1338 = vmatpush1.msra.mxu0 0.0
  %1339 = vmatprep.subr.mxu0 0.0
  %1340 = vmatpush1.msra.mxu0 0.0
  %1341 = vmatprep.subr.mxu0 0.0
  %1342 = vmatpush1.msra.mxu0 0.0
  %1343 = vmatprep.subr.mxu0 0.0
  %1344 = vmatpush1.msra.mxu0 0.0
  %1345 = vmatprep.subr.mxu0 0.0
  %1346 = vmatpush1.msra.mxu0 0.0
  %1347 = vmatprep.subr.mxu0 0.0
  %1348 = vmatpush1.msra.mxu0 0.0
  %1349 = vmatprep.subr.mxu0 0.0
  %1350 = vmatpush1.msra.mxu0 0.0
  %1351 = vmatprep.subr.mxu0 0.0
  %1352 = vmatpush1.msra.mxu0 0.0
  %1353 = vmatprep.subr.mxu0 0.0
  %1354 = vmatpush1.msra.mxu0 0.0
  %1355 = vmatprep.subr.mxu0 0.0
  %1356 = vmatpush1.msra.mxu0 0.0
  %1357 = vmatprep.subr.mxu0 0.0
  %1358 = vmatpush1.msra.mxu0 0.0
  %1359 = vmatprep.subr.mxu0 0.0
  %1360 = vmatpush1.msra.mxu0 0.0
  %1361 = vmatprep.subr.mxu0 0.0
  %1362 = vmatpush1.msra.mxu0 0.0
  %1363 = vmatprep.subr.mxu0 0.0
  %1364 = vmatpush1.msra.mxu0 0.0
  %1365 = vmatprep.subr.mxu0 0.0
  %1366 = vmatpush1.msra.mxu0 0.0
  %1367 = vmatprep.subr.mxu0 0.0
  %1368 = vmatpush1.msra.mxu0 0.0
  %1369 = vmatprep.subr.mxu0 0.0
  %1370 = vmatpush1.msra.mxu0 0.0
  %1371 = vmatprep.subr.mxu0 0.0
  %1372 = vmatpush1.msra.mxu0 0.0
  %1373 = vmatprep.mubr.f32.mxu0 0.0
  %1374 = vmatmul.mubr.f32.gmra.mrb[0].mxu0 %v1307
  %v1375 = vpop.f32.mrb[0].mxu0
  %v1376 = vadd.f32 %v1291, %v1375
  %v1377 = vpop.f32.mrb[0].mxu0
  %1378 = vdwg.mxu0
  %v1379 = vadd.f32 %v1376, %v1062
  %v1380 = vxor.u32 %v1379, 2147483648
  %v1381 = vmul.f32 %v1380, 1.442695
  %v1382 = vpow.pop %v1381
  %v1383 = vadd.f32 %v1382, 1.0
  %v1384 = vrcp.pop %v1383
  %v1385 = vmul.f32 1.0, %v1384
  %v1386 = vtanh.pop %v1379
  %v1387 = vmul.f32 %v1385, %v1082
  %1389 = vrot.lane.b32.xlu0 %v1386, 64
  %v1390 = vpop.permute.xlu0 %1389
  %v1392 = vmul.f32 %v1385, %v1390
  %1394 = vrot.lane.b32.xlu0 %v1392, 32
  %v1395 = vpop.permute.xlu0 %1394
  %v1397 = vadd.f32 %v1387, %v1395
  %v1398 = vtanh.pop %v1397
  %1400 = vrot.lane.b32.xlu0 %v1398, 64
  %v1401 = vpop.permute.xlu0 %1400
  %v1403 = vmul.f32 %v1385, %v1401
  %1404 = vmatprep.subr.mxu0 0.0
  %1405 = vmatpush1.msra.mxu0 %v762
  %1406 = vmatprep.subr.mxu0 0.0
  %1407 = vmatpush1.msra.mxu0 %v763
  %1408 = vmatprep.subr.mxu0 0.0
  %1409 = vmatpush1.msra.mxu0 %v764
  %1410 = vmatprep.subr.mxu0 0.0
  %1411 = vmatpush1.msra.mxu0 %v765
  %1412 = vmatprep.subr.mxu0 0.0
  %1413 = vmatpush1.msra.mxu0 0.0
  %1414 = vmatprep.subr.mxu0 0.0
  %1415 = vmatpush1.msra.mxu0 0.0
  %1416 = vmatprep.subr.mxu0 0.0
  %1417 = vmatpush1.msra.mxu0 0.0
  %1418 = vmatprep.subr.mxu0 0.0
  %1419 = vmatpush1.msra.mxu0 0.0
  %1420 = vmatprep.subr.mxu0 0.0
  %1421 = vmatpush1.msra.mxu0 0.0
  %1422 = vmatprep.subr.mxu0 0.0
  %1423 = vmatpush1.msra.mxu0 0.0
  %1424 = vmatprep.subr.mxu0 0.0
  %1425 = vmatpush1.msra.mxu0 0.0
  %1426 = vmatprep.subr.mxu0 0.0
  %1427 = vmatpush1.msra.mxu0 0.0
  %1428 = vmatprep.subr.mxu0 0.0
  %1429 = vmatpush1.msra.mxu0 0.0
  %1430 = vmatprep.subr.mxu0 0.0
  %1431 = vmatpush1.msra.mxu0 0.0
  %1432 = vmatprep.subr.mxu0 0.0
  %1433 = vmatpush1.msra.mxu0 0.0
  %1434 = vmatprep.subr.mxu0 0.0
  %1435 = vmatpush1.msra.mxu0 0.0
  %1436 = vmatprep.subr.mxu0 0.0
  %1437 = vmatpush1.msra.mxu0 0.0
  %1438 = vmatprep.subr.mxu0 0.0
  %1439 = vmatpush1.msra.mxu0 0.0
  %1440 = vmatprep.subr.mxu0 0.0
  %1441 = vmatpush1.msra.mxu0 0.0
  %1442 = vmatprep.subr.mxu0 0.0
  %1443 = vmatpush1.msra.mxu0 0.0
  %1444 = vmatprep.subr.mxu0 0.0
  %1445 = vmatpush1.msra.mxu0 0.0
  %1446 = vmatprep.subr.mxu0 0.0
  %1447 = vmatpush1.msra.mxu0 0.0
  %1448 = vmatprep.subr.mxu0 0.0
  %1449 = vmatpush1.msra.mxu0 0.0
  %1450 = vmatprep.subr.mxu0 0.0
  %1451 = vmatpush1.msra.mxu0 0.0
  %1452 = vmatprep.subr.mxu0 0.0
  %1453 = vmatpush1.msra.mxu0 0.0
  %1454 = vmatprep.subr.mxu0 0.0
  %1455 = vmatpush1.msra.mxu0 0.0
  %1456 = vmatprep.subr.mxu0 0.0
  %1457 = vmatpush1.msra.mxu0 0.0
  %1458 = vmatprep.subr.mxu0 0.0
  %1459 = vmatpush1.msra.mxu0 0.0
  %1460 = vmatprep.subr.mxu0 0.0
  %1461 = vmatpush1.msra.mxu0 0.0
  %1462 = vmatprep.subr.mxu0 0.0
  %1463 = vmatpush1.msra.mxu0 0.0
  %1464 = vmatprep.subr.mxu0 0.0
  %1465 = vmatpush1.msra.mxu0 0.0
  %1466 = vmatprep.subr.mxu0 0.0
  %1467 = vmatpush1.msra.mxu0 0.0
  %1468 = vmatprep.mubr.f32.mxu0 0.0
  %1469 = vmatmul.mubr.f32.gmra.mrb[0].mxu0 %v1307
  %v1470 = vpop.f32.mrb[0].mxu0
  %v1471 = vadd.f32 0.0, %v1470
  %v1472 = vpop.f32.mrb[0].mxu0
  %1473 = vdwg.mxu0
  %v1475 = vrot.slane %v1471, 6
  %v1476 = vrot.slane %v1471, 7
  %v1479 = vadd.f32 %v756, %v1475
  %v1480 = vadd.f32 %v760, %v1476
  %v1481 = vxor.u32 %v1479, 2147483648
  %v1482 = vxor.u32 %v1480, 2147483648
  %v1483 = vmul.f32 %v1481, 1.442695
  %v1484 = vpow.pop %v1483
  %v1485 = vmul.f32 %v1482, 1.442695
  %v1486 = vpow.pop %v1485
  %v1487 = vadd.f32 %v1484, 1.0
  %v1488 = vadd.f32 %v1486, 1.0
  %v1489 = vrcp.pop %v1487
  %v1490 = vmul.f32 1.0, %v1489
  %v1491 = vrcp.pop %v1488
  %v1492 = vmul.f32 1.0, %v1491
  %v1493 = vtanh.pop %v1479
  %v1494 = vtanh.pop %v1480
  %v1497 = vrot.slane %v1205, 7
  %v1498 = vrot.slane %v1206, 7
  %v1501 = vmul.f32 %v1490, %v1497
  %v1502 = vmul.f32 %v1492, %v1498
  %1505 = vrot.lane.b32.xlu0 %v1493, 64
  %v1506 = vpop.permute.xlu0 %1505
  %1507 = vrot.lane.b32.xlu0 %v1494, 64
  %v1508 = vpop.permute.xlu0 %1507
  %v1511 = vmul.f32 %v1490, %v1506
  %v1512 = vmul.f32 %v1492, %v1508
  %1515 = vrot.lane.b32.xlu0 %v1511, 32
  %v1516 = vpop.permute.xlu0 %1515
  %1517 = vrot.lane.b32.xlu0 %v1512, 32
  %v1518 = vpop.permute.xlu0 %1517
  %v1521 = vadd.f32 %v1501, %v1516
  %v1522 = vadd.f32 %v1502, %v1518
  %v1523 = vtanh.pop %v1521
  %v1524 = vtanh.pop %v1522
  %1527 = vrot.lane.b32.xlu0 %v1523, 64
  %v1528 = vpop.permute.xlu0 %1527
  %1529 = vrot.lane.b32.xlu0 %v1524, 64
  %v1530 = vpop.permute.xlu0 %1529
  %v1533 = vmul.f32 %v1490, %v1528
  %v1534 = vmul.f32 %v1492, %v1530
  %1536 = vrot.lane.b32.xlu0 %v1403, 32
  %v1537 = vpop.permute.xlu0 %1536
  %v1538 = vsel %vm775, %v1537, 0
  %1540 = vmatprep.subr.mxu0 0.0
  %1541 = vmatpush1.msra.mxu0 %v770
  %1542 = vmatprep.subr.mxu0 0.0
  %1543 = vmatpush1.msra.mxu0 %v771
  %1544 = vmatprep.subr.mxu0 0.0
  %1545 = vmatpush1.msra.mxu0 %v772
  %1546 = vmatprep.subr.mxu0 0.0
  %1547 = vmatpush1.msra.mxu0 %v773
  %1548 = vmatprep.subr.mxu0 0.0
  %1549 = vmatpush1.msra.mxu0 0.0
  %1550 = vmatprep.subr.mxu0 0.0
  %1551 = vmatpush1.msra.mxu0 0.0
  %1552 = vmatprep.subr.mxu0 0.0
  %1553 = vmatpush1.msra.mxu0 0.0
  %1554 = vmatprep.subr.mxu0 0.0
  %1555 = vmatpush1.msra.mxu0 0.0
  %1556 = vmatprep.subr.mxu0 0.0
  %1557 = vmatpush1.msra.mxu0 0.0
  %1558 = vmatprep.subr.mxu0 0.0
  %1559 = vmatpush1.msra.mxu0 0.0
  %1560 = vmatprep.subr.mxu0 0.0
  %1561 = vmatpush1.msra.mxu0 0.0
  %1562 = vmatprep.subr.mxu0 0.0
  %1563 = vmatpush1.msra.mxu0 0.0
  %1564 = vmatprep.subr.mxu0 0.0
  %1565 = vmatpush1.msra.mxu0 0.0
  %1566 = vmatprep.subr.mxu0 0.0
  %1567 = vmatpush1.msra.mxu0 0.0
  %1568 = vmatprep.subr.mxu0 0.0
  %1569 = vmatpush1.msra.mxu0 0.0
  %1570 = vmatprep.subr.mxu0 0.0
  %1571 = vmatpush1.msra.mxu0 0.0
  %1572 = vmatprep.subr.mxu0 0.0
  %1573 = vmatpush1.msra.mxu0 0.0
  %1574 = vmatprep.subr.mxu0 0.0
  %1575 = vmatpush1.msra.mxu0 0.0
  %1576 = vmatprep.subr.mxu0 0.0
  %1577 = vmatpush1.msra.mxu0 0.0
  %1578 = vmatprep.subr.mxu0 0.0
  %1579 = vmatpush1.msra.mxu0 0.0
  %1580 = vmatprep.subr.mxu0 0.0
  %1581 = vmatpush1.msra.mxu0 0.0
  %1582 = vmatprep.subr.mxu0 0.0
  %1583 = vmatpush1.msra.mxu0 0.0
  %1584 = vmatprep.subr.mxu0 0.0
  %1585 = vmatpush1.msra.mxu0 0.0
  %1586 = vmatprep.subr.mxu0 0.0
  %1587 = vmatpush1.msra.mxu0 0.0
  %1588 = vmatprep.subr.mxu0 0.0
  %1589 = vmatpush1.msra.mxu0 0.0
  %1590 = vmatprep.subr.mxu0 0.0
  %1591 = vmatpush1.msra.mxu0 0.0
  %1592 = vmatprep.subr.mxu0 0.0
  %1593 = vmatpush1.msra.mxu0 0.0
  %1594 = vmatprep.subr.mxu0 0.0
  %1595 = vmatpush1.msra.mxu0 0.0
  %1596 = vmatprep.subr.mxu0 0.0
  %1597 = vmatpush1.msra.mxu0 0.0
  %1598 = vmatprep.subr.mxu0 0.0
  %1599 = vmatpush1.msra.mxu0 0.0
  %1600 = vmatprep.subr.mxu0 0.0
  %1601 = vmatpush1.msra.mxu0 0.0
  %1602 = vmatprep.subr.mxu0 0.0
  %1603 = vmatpush1.msra.mxu0 0.0
  %1604 = vmatprep.mubr.f32.mxu0 0.0
  %1605 = vmatmul.mubr.f32.gmra.mrb[0].mxu0 %v1538
  %v1606 = vpop.f32.mrb[0].mxu0
  %v1607 = vadd.f32 0.0, %v1606
  %v1608 = vpop.f32.mrb[0].mxu0
  %1609 = vdwg.mxu0
  %v1612 = vlaneseq
  %v1613 = vshrl.u32 %v1612, 7
  %v1614 = vsub.s32 2, %v1613
  %v1615 = vrot.slane %v1533, %v1614
  %v1616 = vlaneseq
  %v1617 = vshrl.u32 %v1616, 7
  %v1618 = vsub.s32 2, %v1617
  %v1619 = vrot.slane %v1534, %v1618
  %v1620 = vsel %vm680, %v1619, %v1615
  %1621 = vrot.lane.b32.xlu0 %v1620, 32
  %v1622 = vpop.permute.xlu0 %1621
  %v1623 = vsel %vm775, %v1622, 0
  %1625 = vmatprep.subr.mxu0 0.0
  %1626 = vmatpush1.msra.mxu0 %v766
  %1627 = vmatprep.subr.mxu0 0.0
  %1628 = vmatpush1.msra.mxu0 %v767
  %1629 = vmatprep.subr.mxu0 0.0
  %1630 = vmatpush1.msra.mxu0 %v768
  %1631 = vmatprep.subr.mxu0 0.0
  %1632 = vmatpush1.msra.mxu0 %v769
  %1633 = vmatprep.subr.mxu0 0.0
  %1634 = vmatpush1.msra.mxu0 0.0
  %1635 = vmatprep.subr.mxu0 0.0
  %1636 = vmatpush1.msra.mxu0 0.0
  %1637 = vmatprep.subr.mxu0 0.0
  %1638 = vmatpush1.msra.mxu0 0.0
  %1639 = vmatprep.subr.mxu0 0.0
  %1640 = vmatpush1.msra.mxu0 0.0
  %1641 = vmatprep.subr.mxu0 0.0
  %1642 = vmatpush1.msra.mxu0 0.0
  %1643 = vmatprep.subr.mxu0 0.0
  %1644 = vmatpush1.msra.mxu0 0.0
  %1645 = vmatprep.subr.mxu0 0.0
  %1646 = vmatpush1.msra.mxu0 0.0
  %1647 = vmatprep.subr.mxu0 0.0
  %1648 = vmatpush1.msra.mxu0 0.0
  %1649 = vmatprep.subr.mxu0 0.0
  %1650 = vmatpush1.msra.mxu0 0.0
  %1651 = vmatprep.subr.mxu0 0.0
  %1652 = vmatpush1.msra.mxu0 0.0
  %1653 = vmatprep.subr.mxu0 0.0
  %1654 = vmatpush1.msra.mxu0 0.0
  %1655 = vmatprep.subr.mxu0 0.0
  %1656 = vmatpush1.msra.mxu0 0.0
  %1657 = vmatprep.subr.mxu0 0.0
  %1658 = vmatpush1.msra.mxu0 0.0
  %1659 = vmatprep.subr.mxu0 0.0
  %1660 = vmatpush1.msra.mxu0 0.0
  %1661 = vmatprep.subr.mxu0 0.0
  %1662 = vmatpush1.msra.mxu0 0.0
  %1663 = vmatprep.subr.mxu0 0.0
  %1664 = vmatpush1.msra.mxu0 0.0
  %1665 = vmatprep.subr.mxu0 0.0
  %1666 = vmatpush1.msra.mxu0 0.0
  %1667 = vmatprep.subr.mxu0 0.0
  %1668 = vmatpush1.msra.mxu0 0.0
  %1669 = vmatprep.subr.mxu0 0.0
  %1670 = vmatpush1.msra.mxu0 0.0
  %1671 = vmatprep.subr.mxu0 0.0
  %1672 = vmatpush1.msra.mxu0 0.0
  %1673 = vmatprep.subr.mxu0 0.0
  %1674 = vmatpush1.msra.mxu0 0.0
  %1675 = vmatprep.subr.mxu0 0.0
  %1676 = vmatpush1.msra.mxu0 0.0
  %1677 = vmatprep.subr.mxu0 0.0
  %1678 = vmatpush1.msra.mxu0 0.0
  %1679 = vmatprep.subr.mxu0 0.0
  %1680 = vmatpush1.msra.mxu0 0.0
  %1681 = vmatprep.subr.mxu0 0.0
  %1682 = vmatpush1.msra.mxu0 0.0
  %1683 = vmatprep.subr.mxu0 0.0
  %1684 = vmatpush1.msra.mxu0 0.0
  %1685 = vmatprep.subr.mxu0 0.0
  %1686 = vmatpush1.msra.mxu0 0.0
  %1687 = vmatprep.subr.mxu0 0.0
  %1688 = vmatpush1.msra.mxu0 0.0
  %1689 = vmatprep.mubr.f32.mxu0 0.0
  %1690 = vmatmul.mubr.f32.gmra.mrb[0].mxu0 %v1623
  %v1691 = vpop.f32.mrb[0].mxu0
  %v1692 = vadd.f32 %v1607, %v1691
  %v1693 = vpop.f32.mrb[0].mxu0
  %1694 = vdwg.mxu0
  %v1695 = vadd.f32 %v1692, %v1062
  %v1696 = vxor.u32 %v1695, 2147483648
  %v1697 = vmul.f32 %v1696, 1.442695
  %v1698 = vpow.pop %v1697
  %v1699 = vadd.f32 %v1698, 1.0
  %v1700 = vrcp.pop %v1699
  %v1701 = vmul.f32 1.0, %v1700
  %v1702 = vtanh.pop %v1695
  %v1703 = vmul.f32 %v1701, %v1397
  %1705 = vrot.lane.b32.xlu0 %v1702, 64
  %v1706 = vpop.permute.xlu0 %1705
  %v1708 = vmul.f32 %v1701, %v1706
  %1710 = vrot.lane.b32.xlu0 %v1708, 32
  %v1711 = vpop.permute.xlu0 %1710
  %v1713 = vadd.f32 %v1703, %v1711
  %v1714 = vtanh.pop %v1713
  %1716 = vrot.lane.b32.xlu0 %v1714, 64
  %v1717 = vpop.permute.xlu0 %1716
  %v1719 = vmul.f32 %v1701, %v1717
  %1720 = vmatprep.subr.mxu0 0.0
  %1721 = vmatpush1.msra.mxu0 %v762
  %1722 = vmatprep.subr.mxu0 0.0
  %1723 = vmatpush1.msra.mxu0 %v763
  %1724 = vmatprep.subr.mxu0 0.0
  %1725 = vmatpush1.msra.mxu0 %v764
  %1726 = vmatprep.subr.mxu0 0.0
  %1727 = vmatpush1.msra.mxu0 %v765
  %1728 = vmatprep.subr.mxu0 0.0
  %1729 = vmatpush1.msra.mxu0 0.0
  %1730 = vmatprep.subr.mxu0 0.0
  %1731 = vmatpush1.msra.mxu0 0.0
  %1732 = vmatprep.subr.mxu0 0.0
  %1733 = vmatpush1.msra.mxu0 0.0
  %1734 = vmatprep.subr.mxu0 0.0
  %1735 = vmatpush1.msra.mxu0 0.0
  %1736 = vmatprep.subr.mxu0 0.0
  %1737 = vmatpush1.msra.mxu0 0.0
  %1738 = vmatprep.subr.mxu0 0.0
  %1739 = vmatpush1.msra.mxu0 0.0
  %1740 = vmatprep.subr.mxu0 0.0
  %1741 = vmatpush1.msra.mxu0 0.0
  %1742 = vmatprep.subr.mxu0 0.0
  %1743 = vmatpush1.msra.mxu0 0.0
  %1744 = vmatprep.subr.mxu0 0.0
  %1745 = vmatpush1.msra.mxu0 0.0
  %1746 = vmatprep.subr.mxu0 0.0
  %1747 = vmatpush1.msra.mxu0 0.0
  %1748 = vmatprep.subr.mxu0 0.0
  %1749 = vmatpush1.msra.mxu0 0.0
  %1750 = vmatprep.subr.mxu0 0.0
  %1751 = vmatpush1.msra.mxu0 0.0
  %1752 = vmatprep.subr.mxu0 0.0
  %1753 = vmatpush1.msra.mxu0 0.0
  %1754 = vmatprep.subr.mxu0 0.0
  %1755 = vmatpush1.msra.mxu0 0.0
  %1756 = vmatprep.subr.mxu0 0.0
  %1757 = vmatpush1.msra.mxu0 0.0
  %1758 = vmatprep.subr.mxu0 0.0
  %1759 = vmatpush1.msra.mxu0 0.0
  %1760 = vmatprep.subr.mxu0 0.0
  %1761 = vmatpush1.msra.mxu0 0.0
  %1762 = vmatprep.subr.mxu0 0.0
  %1763 = vmatpush1.msra.mxu0 0.0
  %1764 = vmatprep.subr.mxu0 0.0
  %1765 = vmatpush1.msra.mxu0 0.0
  %1766 = vmatprep.subr.mxu0 0.0
  %1767 = vmatpush1.msra.mxu0 0.0
  %1768 = vmatprep.subr.mxu0 0.0
  %1769 = vmatpush1.msra.mxu0 0.0
  %1770 = vmatprep.subr.mxu0 0.0
  %1771 = vmatpush1.msra.mxu0 0.0
  %1772 = vmatprep.subr.mxu0 0.0
  %1773 = vmatpush1.msra.mxu0 0.0
  %1774 = vmatprep.subr.mxu0 0.0
  %1775 = vmatpush1.msra.mxu0 0.0
  %1776 = vmatprep.subr.mxu0 0.0
  %1777 = vmatpush1.msra.mxu0 0.0
  %1778 = vmatprep.subr.mxu0 0.0
  %1779 = vmatpush1.msra.mxu0 0.0
  %1780 = vmatprep.subr.mxu0 0.0
  %1781 = vmatpush1.msra.mxu0 0.0
  %1782 = vmatprep.subr.mxu0 0.0
  %1783 = vmatpush1.msra.mxu0 0.0
  %1784 = vmatprep.mubr.f32.mxu0 0.0
  %1785 = vmatmul.mubr.f32.gmra.mrb[0].mxu0 %v1623
  %v1786 = vpop.f32.mrb[0].mxu0
  %v1787 = vadd.f32 0.0, %v1786
  %v1788 = vpop.f32.mrb[0].mxu0
  %1789 = vdwg.mxu0
  %v1791 = vrot.slane %v1787, 5
  %v1792 = vrot.slane %v1787, 6
  %v1795 = vadd.f32 %v756, %v1791
  %v1796 = vadd.f32 %v760, %v1792
  %v1797 = vxor.u32 %v1795, 2147483648
  %v1798 = vxor.u32 %v1796, 2147483648
  %v1799 = vmul.f32 %v1797, 1.442695
  %v1800 = vpow.pop %v1799
  %v1801 = vmul.f32 %v1798, 1.442695
  %v1802 = vpow.pop %v1801
  %v1803 = vadd.f32 %v1800, 1.0
  %v1804 = vadd.f32 %v1802, 1.0
  %v1805 = vrcp.pop %v1803
  %v1806 = vmul.f32 1.0, %v1805
  %v1807 = vrcp.pop %v1804
  %v1808 = vmul.f32 1.0, %v1807
  %v1809 = vtanh.pop %v1795
  %v1810 = vtanh.pop %v1796
  %v1813 = vrot.slane %v1521, 7
  %v1814 = vrot.slane %v1522, 7
  %v1817 = vmul.f32 %v1806, %v1813
  %v1818 = vmul.f32 %v1808, %v1814
  %1821 = vrot.lane.b32.xlu0 %v1809, 64
  %v1822 = vpop.permute.xlu0 %1821
  %1823 = vrot.lane.b32.xlu0 %v1810, 64
  %v1824 = vpop.permute.xlu0 %1823
  %v1827 = vmul.f32 %v1806, %v1822
  %v1828 = vmul.f32 %v1808, %v1824
  %1831 = vrot.lane.b32.xlu0 %v1827, 32
  %v1832 = vpop.permute.xlu0 %1831
  %1833 = vrot.lane.b32.xlu0 %v1828, 32
  %v1834 = vpop.permute.xlu0 %1833
  %v1837 = vadd.f32 %v1817, %v1832
  %v1838 = vadd.f32 %v1818, %v1834
  %v1839 = vtanh.pop %v1837
  %v1840 = vtanh.pop %v1838
  %1843 = vrot.lane.b32.xlu0 %v1839, 64
  %v1844 = vpop.permute.xlu0 %1843
  %1845 = vrot.lane.b32.xlu0 %v1840, 64
  %v1846 = vpop.permute.xlu0 %1845
  %v1849 = vmul.f32 %v1806, %v1844
  %v1850 = vmul.f32 %v1808, %v1846
  %1852 = vrot.lane.b32.xlu0 %v1719, 32
  %v1853 = vpop.permute.xlu0 %1852
  %v1854 = vsel %vm775, %v1853, 0
  %1856 = vmatprep.subr.mxu0 0.0
  %1857 = vmatpush1.msra.mxu0 %v770
  %1858 = vmatprep.subr.mxu0 0.0
  %1859 = vmatpush1.msra.mxu0 %v771
  %1860 = vmatprep.subr.mxu0 0.0
  %1861 = vmatpush1.msra.mxu0 %v772
  %1862 = vmatprep.subr.mxu0 0.0
  %1863 = vmatpush1.msra.mxu0 %v773
  %1864 = vmatprep.subr.mxu0 0.0
  %1865 = vmatpush1.msra.mxu0 0.0
  %1866 = vmatprep.subr.mxu0 0.0
  %1867 = vmatpush1.msra.mxu0 0.0
  %1868 = vmatprep.subr.mxu0 0.0
  %1869 = vmatpush1.msra.mxu0 0.0
  %1870 = vmatprep.subr.mxu0 0.0
  %1871 = vmatpush1.msra.mxu0 0.0
  %1872 = vmatprep.subr.mxu0 0.0
  %1873 = vmatpush1.msra.mxu0 0.0
  %1874 = vmatprep.subr.mxu0 0.0
  %1875 = vmatpush1.msra.mxu0 0.0
  %1876 = vmatprep.subr.mxu0 0.0
  %1877 = vmatpush1.msra.mxu0 0.0
  %1878 = vmatprep.subr.mxu0 0.0
  %1879 = vmatpush1.msra.mxu0 0.0
  %1880 = vmatprep.subr.mxu0 0.0
  %1881 = vmatpush1.msra.mxu0 0.0
  %1882 = vmatprep.subr.mxu0 0.0
  %1883 = vmatpush1.msra.mxu0 0.0
  %1884 = vmatprep.subr.mxu0 0.0
  %1885 = vmatpush1.msra.mxu0 0.0
  %1886 = vmatprep.subr.mxu0 0.0
  %1887 = vmatpush1.msra.mxu0 0.0
  %1888 = vmatprep.subr.mxu0 0.0
  %1889 = vmatpush1.msra.mxu0 0.0
  %1890 = vmatprep.subr.mxu0 0.0
  %1891 = vmatpush1.msra.mxu0 0.0
  %1892 = vmatprep.subr.mxu0 0.0
  %1893 = vmatpush1.msra.mxu0 0.0
  %1894 = vmatprep.subr.mxu0 0.0
  %1895 = vmatpush1.msra.mxu0 0.0
  %1896 = vmatprep.subr.mxu0 0.0
  %1897 = vmatpush1.msra.mxu0 0.0
  %1898 = vmatprep.subr.mxu0 0.0
  %1899 = vmatpush1.msra.mxu0 0.0
  %1900 = vmatprep.subr.mxu0 0.0
  %1901 = vmatpush1.msra.mxu0 0.0
  %1902 = vmatprep.subr.mxu0 0.0
  %1903 = vmatpush1.msra.mxu0 0.0
  %1904 = vmatprep.subr.mxu0 0.0
  %1905 = vmatpush1.msra.mxu0 0.0
  %1906 = vmatprep.subr.mxu0 0.0
  %1907 = vmatpush1.msra.mxu0 0.0
  %1908 = vmatprep.subr.mxu0 0.0
  %1909 = vmatpush1.msra.mxu0 0.0
  %1910 = vmatprep.subr.mxu0 0.0
  %1911 = vmatpush1.msra.mxu0 0.0
  %1912 = vmatprep.subr.mxu0 0.0
  %1913 = vmatpush1.msra.mxu0 0.0
  %1914 = vmatprep.subr.mxu0 0.0
  %1915 = vmatpush1.msra.mxu0 0.0
  %1916 = vmatprep.subr.mxu0 0.0
  %1917 = vmatpush1.msra.mxu0 0.0
  %1918 = vmatprep.subr.mxu0 0.0
  %1919 = vmatpush1.msra.mxu0 0.0
  %1920 = vmatprep.mubr.f32.mxu0 0.0
  %1921 = vmatmul.mubr.f32.gmra.mrb[0].mxu0 %v1854
  %v1922 = vpop.f32.mrb[0].mxu0
  %v1923 = vadd.f32 0.0, %v1922
  %v1924 = vpop.f32.mrb[0].mxu0
  %1925 = vdwg.mxu0
  %v1928 = vlaneseq
  %v1929 = vshrl.u32 %v1928, 7
  %v1930 = vsub.s32 3, %v1929
  %v1931 = vrot.slane %v1849, %v1930
  %v1932 = vlaneseq
  %v1933 = vshrl.u32 %v1932, 7
  %v1934 = vsub.s32 3, %v1933
  %v1935 = vrot.slane %v1850, %v1934
  %v1936 = vsel %vm680, %v1935, %v1931
  %1937 = vrot.lane.b32.xlu0 %v1936, 32
  %v1938 = vpop.permute.xlu0 %1937
  %v1939 = vsel %vm775, %v1938, 0
  %1941 = vmatprep.subr.mxu0 0.0
  %1942 = vmatpush1.msra.mxu0 %v766
  %1943 = vmatprep.subr.mxu0 0.0
  %1944 = vmatpush1.msra.mxu0 %v767
  %1945 = vmatprep.subr.mxu0 0.0
  %1946 = vmatpush1.msra.mxu0 %v768
  %1947 = vmatprep.subr.mxu0 0.0
  %1948 = vmatpush1.msra.mxu0 %v769
  %1949 = vmatprep.subr.mxu0 0.0
  %1950 = vmatpush1.msra.mxu0 0.0
  %1951 = vmatprep.subr.mxu0 0.0
  %1952 = vmatpush1.msra.mxu0 0.0
  %1953 = vmatprep.subr.mxu0 0.0
  %1954 = vmatpush1.msra.mxu0 0.0
  %1955 = vmatprep.subr.mxu0 0.0
  %1956 = vmatpush1.msra.mxu0 0.0
  %1957 = vmatprep.subr.mxu0 0.0
  %1958 = vmatpush1.msra.mxu0 0.0
  %1959 = vmatprep.subr.mxu0 0.0
  %1960 = vmatpush1.msra.mxu0 0.0
  %1961 = vmatprep.subr.mxu0 0.0
  %1962 = vmatpush1.msra.mxu0 0.0
  %1963 = vmatprep.subr.mxu0 0.0
  %1964 = vmatpush1.msra.mxu0 0.0
  %1965 = vmatprep.subr.mxu0 0.0
  %1966 = vmatpush1.msra.mxu0 0.0
  %1967 = vmatprep.subr.mxu0 0.0
  %1968 = vmatpush1.msra.mxu0 0.0
  %1969 = vmatprep.subr.mxu0 0.0
  %1970 = vmatpush1.msra.mxu0 0.0
  %1971 = vmatprep.subr.mxu0 0.0
  %1972 = vmatpush1.msra.mxu0 0.0
  %1973 = vmatprep.subr.mxu0 0.0
  %1974 = vmatpush1.msra.mxu0 0.0
  %1975 = vmatprep.subr.mxu0 0.0
  %1976 = vmatpush1.msra.mxu0 0.0
  %1977 = vmatprep.subr.mxu0 0.0
  %1978 = vmatpush1.msra.mxu0 0.0
  %1979 = vmatprep.subr.mxu0 0.0
  %1980 = vmatpush1.msra.mxu0 0.0
  %1981 = vmatprep.subr.mxu0 0.0
  %1982 = vmatpush1.msra.mxu0 0.0
  %1983 = vmatprep.subr.mxu0 0.0
  %1984 = vmatpush1.msra.mxu0 0.0
  %1985 = vmatprep.subr.mxu0 0.0
  %1986 = vmatpush1.msra.mxu0 0.0
  %1987 = vmatprep.subr.mxu0 0.0
  %1988 = vmatpush1.msra.mxu0 0.0
  %1989 = vmatprep.subr.mxu0 0.0
  %1990 = vmatpush1.msra.mxu0 0.0
  %1991 = vmatprep.subr.mxu0 0.0
  %1992 = vmatpush1.msra.mxu0 0.0
  %1993 = vmatprep.subr.mxu0 0.0
  %1994 = vmatpush1.msra.mxu0 0.0
  %1995 = vmatprep.subr.mxu0 0.0
  %1996 = vmatpush1.msra.mxu0 0.0
  %1997 = vmatprep.subr.mxu0 0.0
  %1998 = vmatpush1.msra.mxu0 0.0
  %1999 = vmatprep.subr.mxu0 0.0
  %2000 = vmatpush1.msra.mxu0 0.0
  %2001 = vmatprep.subr.mxu0 0.0
  %2002 = vmatpush1.msra.mxu0 0.0
  %2003 = vmatprep.subr.mxu0 0.0
  %2004 = vmatpush1.msra.mxu0 0.0
  %2005 = vmatprep.mubr.f32.mxu0 0.0
  %2006 = vmatmul.mubr.f32.gmra.mrb[0].mxu0 %v1939
  %v2007 = vpop.f32.mrb[0].mxu0
  %v2008 = vadd.f32 %v1923, %v2007
  %v2009 = vpop.f32.mrb[0].mxu0
  %2010 = vdwg.mxu0
  %v2011 = vadd.f32 %v2008, %v1062
  %v2012 = vxor.u32 %v2011, 2147483648
  %v2013 = vmul.f32 %v2012, 1.442695
  %v2014 = vpow.pop %v2013
  %v2015 = vadd.f32 %v2014, 1.0
  %v2016 = vrcp.pop %v2015
  %v2017 = vmul.f32 1.0, %v2016
  %v2018 = vtanh.pop %v2011
  %v2019 = vmul.f32 %v2017, %v1713
  %2021 = vrot.lane.b32.xlu0 %v2018, 64
  %v2022 = vpop.permute.xlu0 %2021
  %v2024 = vmul.f32 %v2017, %v2022
  %2026 = vrot.lane.b32.xlu0 %v2024, 32
  %v2027 = vpop.permute.xlu0 %2026
  %v2029 = vadd.f32 %v2019, %v2027
  %v2030 = vtanh.pop %v2029
  %2032 = vrot.lane.b32.xlu0 %v2030, 64
  %v2033 = vpop.permute.xlu0 %2032
  %v2035 = vmul.f32 %v2017, %v2033
  %v2036 = vld [vmem:[%s11] sm:$0xff]
  %v2037 = vld [vmem:[%s11 + $0x8] sm:$0xff]
  %v2038 = vld [vmem:[%s11 + $0x10] sm:$0xff]
  %v2039 = vld [vmem:[%s11 + $0x18] sm:$0xff]
  %v2040 = vld [vmem:[#allocation2] sm:$0x1]
  %v2042 = vlaneseq
  %v2043 = vshrl.u32 %v2042, 7
  %v2044 = vsub.s32 0, %v2043
  %v2045 = vrot.slane %v2040, %v2044
  %2048 = vrot.lane.b32.xlu0 %v2035, 32
  %v2049 = vpop.permute.xlu0 %2048
  %v2050 = vsel %vm775, %v2049, 0
  %2052 = vmatprep.subr.mxu0 0.0
  %2053 = vmatpush1.msra.mxu0 %v2036
  %2054 = vmatprep.subr.mxu0 0.0
  %2055 = vmatpush1.msra.mxu0 %v2037
  %2056 = vmatprep.subr.mxu0 0.0
  %2057 = vmatpush1.msra.mxu0 %v2038
  %2058 = vmatprep.subr.mxu0 0.0
  %2059 = vmatpush1.msra.mxu0 %v2039
  %2060 = vmatprep.subr.mxu0 0.0
  %2061 = vmatpush1.msra.mxu0 0.0
  %2062 = vmatprep.subr.mxu0 0.0
  %2063 = vmatpush1.msra.mxu0 0.0
  %2064 = vmatprep.subr.mxu0 0.0
  %2065 = vmatpush1.msra.mxu0 0.0
  %2066 = vmatprep.subr.mxu0 0.0
  %2067 = vmatpush1.msra.mxu0 0.0
  %2068 = vmatprep.subr.mxu0 0.0
  %2069 = vmatpush1.msra.mxu0 0.0
  %2070 = vmatprep.subr.mxu0 0.0
  %2071 = vmatpush1.msra.mxu0 0.0
  %2072 = vmatprep.subr.mxu0 0.0
  %2073 = vmatpush1.msra.mxu0 0.0
  %2074 = vmatprep.subr.mxu0 0.0
  %2075 = vmatpush1.msra.mxu0 0.0
  %2076 = vmatprep.subr.mxu0 0.0
  %2077 = vmatpush1.msra.mxu0 0.0
  %2078 = vmatprep.subr.mxu0 0.0
  %2079 = vmatpush1.msra.mxu0 0.0
  %2080 = vmatprep.subr.mxu0 0.0
  %2081 = vmatpush1.msra.mxu0 0.0
  %2082 = vmatprep.subr.mxu0 0.0
  %2083 = vmatpush1.msra.mxu0 0.0
  %2084 = vmatprep.subr.mxu0 0.0
  %2085 = vmatpush1.msra.mxu0 0.0
  %2086 = vmatprep.subr.mxu0 0.0
  %2087 = vmatpush1.msra.mxu0 0.0
  %2088 = vmatprep.subr.mxu0 0.0
  %2089 = vmatpush1.msra.mxu0 0.0
  %2090 = vmatprep.subr.mxu0 0.0
  %2091 = vmatpush1.msra.mxu0 0.0
  %2092 = vmatprep.subr.mxu0 0.0
  %2093 = vmatpush1.msra.mxu0 0.0
  %2094 = vmatprep.subr.mxu0 0.0
  %2095 = vmatpush1.msra.mxu0 0.0
  %2096 = vmatprep.subr.mxu0 0.0
  %2097 = vmatpush1.msra.mxu0 0.0
  %2098 = vmatprep.subr.mxu0 0.0
  %2099 = vmatpush1.msra.mxu0 0.0
  %2100 = vmatprep.subr.mxu0 0.0
  %2101 = vmatpush1.msra.mxu0 0.0
  %2102 = vmatprep.subr.mxu0 0.0
  %2103 = vmatpush1.msra.mxu0 0.0
  %2104 = vmatprep.subr.mxu0 0.0
  %2105 = vmatpush1.msra.mxu0 0.0
  %2106 = vmatprep.subr.mxu0 0.0
  %2107 = vmatpush1.msra.mxu0 0.0
  %2108 = vmatprep.subr.mxu0 0.0
  %2109 = vmatpush1.msra.mxu0 0.0
  %2110 = vmatprep.subr.mxu0 0.0
  %2111 = vmatpush1.msra.mxu0 0.0
  %2112 = vmatprep.subr.mxu0 0.0
  %2113 = vmatpush1.msra.mxu0 0.0
  %2114 = vmatprep.subr.mxu0 0.0
  %2115 = vmatpush1.msra.mxu0 0.0
  %2116 = vmatprep.mubr.f32.mxu0 0.0
  %2117 = vmatmul.mubr.f32.gmra.mrb[0].mxu0 %v2050
  %v2118 = vpop.f32.mrb[0].mxu0
  %v2119 = vadd.f32 %v2045, %v2118
  %v2120 = vpop.f32.mrb[0].mxu0
  %2121 = vdwg.mxu0
  %v2122 = vxor.u32 %v2119, 2147483648
  %v2123 = vmul.f32 %v2122, 1.442695
  %v2124 = vpow.pop %v2123
  %v2125 = vadd.f32 %v2124, 1.0
  %v2126 = vrcp.pop %v2125
  %v2127 = vmul.f32 1.0, %v2126
  %vm2128 = vcmask 1024
  %2129 = vst.msk [vmem:[%s13] sm:$0x3] %vm2128, %v2127
  // Predicated region
  $region54: #{cnn_lstm_forward.1} parent=0 // pred_check
    _
  $region55: #{cnn_lstm_forward.1} parent=0 // pred_check_branch
    %2131 = sbr.rel (0) target = $region57
  $region56: #{cnn_lstm_forward.1} parent=0 // pred_region
    _
  $region57: #{cnn_lstm_forward.1} parent=0 // pred_fallthru
    _
  // Predicated region
  $region58: #{cnn_lstm_forward.1} parent=0 // pred_check
    _
  $region59: #{cnn_lstm_forward.1} parent=0 // pred_check_branch
    %2133 = sbr.rel (0) target = $region61
  $region60: #{cnn_lstm_forward.1} parent=0 // pred_region
    _
  $region61: #{cnn_lstm_forward.1} parent=0 // pred_fallthru
    _

</llo_original>
